<compile_context>
chip_gen: v5e
topology: v5e:2x2
jax: 0.10.0
libtpu: 0.0.40
codegen_flags: <defaults>
</compile_context>

<pallas_src>
import math
import numpy as np

import jax
import jax.numpy as jnp
from jax.experimental import pallas as pl
from jax.experimental.pallas import tpu as pltpu


# ----------------------------------------------------------------------------
# Static helpers (shared by weight preparation and kernel tracing)
# ----------------------------------------------------------------------------

def _stride_flag(layer, n_layers, stride_on):
    if stride_on == 'all':
        return True
    elif stride_on == 'first':
        return layer == 0
    elif stride_on == 'last':
        return layer == n_layers - 1
    raise ValueError(f'bad stride_on: {stride_on}')


def _phase_terms(s_in, sigma, pad, K):
    """Polyphase decomposition of ConvTranspose1d.

    The input signal is given as `s_in` phases P_q (interleaved index
    t = s_in*u + q).  A conv-transpose with stride `sigma`, padding `pad`,
    kernel K produces s_out = s_in*sigma output phases O_rho
    (interleaved index p = s_out*v + rho) with

        O_rho[:, v] = sum_{(q, k, d) in terms[rho]} W[:, :, k].T @ P_q[:, v + d]

    (out-of-range columns of P_q count as zero).  Derived directly from the
    ConvTranspose1d definition p = t*stride + k - pad.
    """
    s_out = s_in * sigma
    terms = []
    for rho in range(s_out):
        tl = []
        for q in range(s_in):
            for k in range(K):
                num = pad + rho - q * sigma - k
                if num % s_out == 0:
                    tl.append((q, k, num // s_out))
        assert tl, 'empty polyphase output phase (stride too large for kernel)'
        terms.append(tl)
    return terms


def _phase_lengths(L_full, s):
    return [len(range(r, L_full, s)) for r in range(s)]


# ----------------------------------------------------------------------------
# Parameters
# ----------------------------------------------------------------------------

def init_params(key, cfg):
    """Deterministic synthetic parameters, PyTorch ConvTranspose1d layout (C_in, C_out, K)."""
    hidden = cfg['hidden']
    K = cfg['kernel_size']
    cin = hidden + (1 if cfg['depth_variant'] else 0)
    blocks = []
    for l in range(cfg['layers']):
        key, k1, k2, k3, k4 = jax.random.split(key, 5)
        s = cfg['stride'] if _stride_flag(l, cfg['layers'], cfg['stride_on']) else 1
        bound = 1.0 / math.sqrt(cin * K)
        blocks.append(dict(
            stride=s,
            w1=jax.random.uniform(k1, (cin, 2 * hidden, K), jnp.float32, -bound, bound),
            b1=jax.random.uniform(k2, (2 * hidden,), jnp.float32, -bound, bound),
            w2=jax.random.uniform(k3, (cin, hidden, K), jnp.float32, -bound, bound),
            b2=jax.random.uniform(k4, (hidden,), jnp.float32, -bound, bound),
        ))
    return dict(blocks=blocks)


def prepare_params(raw, cfg):
    """Pre-arrange weights into per-output-phase matmul operands (C_out, n_taps*C_in)."""
    K = cfg['kernel_size']
    assert K >= 3 and (K - 3) % 2 == 0 and (K - 1) % 2 == 0, 'kernel_size must be odd >= 3'
    blocks = []
    for bp in raw['blocks']:
        s = bp['stride']
        p1 = (K - 3) // 2          # conv1: pad_delta = 3
        p2 = (K - 1) // 2          # conv2: pad_delta = 1
        terms1 = _phase_terms(1, s, p1, K)
        terms2 = _phase_terms(s, 1, p2, K)
        W1P = [jnp.concatenate([bp['w1'][:, :, k].T for (_, k, _) in tl], axis=1)
               for tl in terms1]
        W2P = [jnp.concatenate([bp['w2'][:, :, k].T for (_, k, _) in tl], axis=1)
               for tl in terms2]
        blocks.append(dict(stride=s,
                           W1P=W1P, b1=bp['b1'][:, None],
                           W2P=W2P, b2=bp['b2'][:, None]))
    return dict(blocks=blocks)


# ----------------------------------------------------------------------------
# Fused Block kernel
# ----------------------------------------------------------------------------

def _apply_block(bw, cfg, h, dval):
    """One fused Block applied to h (B, C, L) channels-first; returns (B, C, L_out)."""
    B, C, L = h.shape
    K = cfg['kernel_size']
    leak = float(cfg['leak'])
    use_ln = bool(cfg['layer_norm'])
    depth_var = bool(cfg['depth_variant'])
    s = bw['stride']

    p1 = (K - 3) // 2
    p2 = (K - 1) // 2
    L1 = (L - 1) * s + K - 2 * p1               # conv1 output length (interleaved)
    L2 = (L1 - 1) + K - 2 * p2                  # conv2 output length
    assert L2 == L1, 'Block requires conv2 (pad_delta=1, stride=1) to preserve length'
    terms1 = _phase_terms(1, s, p1, K)
    terms2 = _phase_terms(s, 1, p2, K)
    M1 = _phase_lengths(L1, s)                  # output phase lengths (conv1 == conv2)

    def kernel(*refs):
        d_ref, h_ref = refs[0], refs[1]
        ix = 2
        w1_refs = refs[ix:ix + s]; ix += s
        b1_ref = refs[ix]; ix += 1
        w2_refs = refs[ix:ix + s]; ix += s
        b2_ref = refs[ix]; ix += 1
        o_refs = refs[ix:]

        dval_s = d_ref[0]

        def with_depth(v):
            if not depth_var:
                return v
            drow = dval_s * jnp.ones((1, v.shape[1]), v.dtype)
            return jnp.concatenate([v, drow], axis=0)

        def pad_lanes(v, hl, hr):
            parts = []
            if hl > 0:
                parts.append(jnp.zeros((v.shape[0], hl), v.dtype))
            parts.append(v)
            if hr > 0:
                parts.append(jnp.zeros((v.shape[0], hr), v.dtype))
            return jnp.concatenate(parts, axis=1) if len(parts) > 1 else v

        def poly_conv(phases, lq, terms, mout, w_list, b_ref_):
            # one lane-dense matmul per output phase; taps collapsed into the
            # contraction dimension (im2col along sublanes).
            nq = len(phases)
            hl = [0] * nq
            hr = [0] * nq
            for rho, tl in enumerate(terms):
                for (q, _, d) in tl:
                    hl[q] = max(hl[q], -d)
                    hr[q] = max(hr[q], mout[rho] + d - lq[q])
            padded = [pad_lanes(phases[q], hl[q], hr[q]) for q in range(nq)]
            b = b_ref_[...]
            outs = []
            for rho, tl in enumerate(terms):
                cols = [padded[q][:, hl[q] + d: hl[q] + d + mout[rho]] for (q, _, d) in tl]
                xcol = cols[0] if len(cols) == 1 else jnp.concatenate(cols, axis=0)
                outs.append(jnp.dot(w_list[rho][...], xcol,
                                    preferred_element_type=jnp.float32) + b)
            return outs

        def norm_act(vals):
            outs = vals
            if use_ln:
                # joint stats over (channels, all time positions / phases)
                cnt = float(sum(v.shape[0] * v.shape[1] for v in vals))
                tot = None
                for v in vals:
                    t = jnp.sum(v, keepdims=True)
                    tot = t if tot is None else tot + t
                mean = tot / cnt
                sq = None
                for v in vals:
                    t = jnp.sum((v - mean) ** 2, keepdims=True)
                    sq = t if sq is None else sq + t
                inv = jax.lax.rsqrt(sq / cnt + 1e-5)
                outs = [(v - mean) * inv for v in vals]
            if leak > 0.0:
                return [jnp.where(v > 0, v, leak * v) for v in outs]
            return [jnp.maximum(v, 0.0) for v in outs]

        x = h_ref[...].astype(jnp.float32)
        xin = with_depth(x)
        lr = poly_conv([xin], [L], terms1, M1, w1_refs, b1_ref)      # conv1 (polyphase)
        l_ph = [v[:C, :] for v in lr]
        r_ph = [v[C:, :] for v in lr]
        r_ph = norm_act(r_ph)                                        # norm1 + act
        r_ph = [with_depth(v) for v in r_ph]                         # depth-cat
        r2 = poly_conv(r_ph, M1, terms2, M1, w2_refs, b2_ref)        # conv2 (stride 1)
        r2 = norm_act(r2)                                            # norm2 + act
        for rho in range(s):
            o_refs[rho][...] = (l_ph[rho] + r2[rho]).astype(o_refs[rho].dtype)

    w_arrays = list(bw['W1P']) + [bw['b1']] + list(bw['W2P']) + [bw['b2']]
    in_specs = [pl.BlockSpec(memory_space=pltpu.MemorySpace.SMEM),         # depth scalar
                pl.BlockSpec((None, C, L), lambda i: (i, 0, 0))]           # per-item input
    in_specs += [pl.BlockSpec(w.shape, lambda i: (0, 0)) for w in w_arrays]

    out_shape = [jax.ShapeDtypeStruct((B, C, M1[r]), h.dtype) for r in range(s)]
    out_specs = [pl.BlockSpec((None, C, M1[r]), lambda i: (i, 0, 0)) for r in range(s)]
    if s == 1:
        out_shape = out_shape[0]
        out_specs = out_specs[0]

    out = pl.pallas_call(
        kernel,
        grid=(B,),
        in_specs=in_specs,
        out_specs=out_specs,
        out_shape=out_shape,
        compiler_params=pltpu.CompilerParams(dimension_semantics=("parallel",)),
    )(dval, h, *w_arrays)

    if s == 1:
        return out
    # Interleave the phase outputs back into time order (cheap XLA op on the
    # block output only; the conv math never touched inserted zeros).
    full = jnp.zeros((B, C, L1), h.dtype)
    for r in range(s):
        full = full.at[:, :, r::s].set(out[r])
    return full


def _make_depth_step(blocks, cfg):
    @jax.jit
    def step(h, dval):
        for bw in blocks:
            h = _apply_block(bw, cfg, h, dval)
        return h
    return step


# ----------------------------------------------------------------------------
# Expand.forward
# ----------------------------------------------------------------------------

def expand_forward(params, cfg, h, N):
    """Expand.forward (eval mode; dropout is training-only and skipped).

    h : (B, hidden) float32;  N : (B,) ints (host).
    Returns (B, hidden, max(N)) float32 (PyTorch NCL layout).
    """
    N = np.asarray(N, dtype=np.int64)
    B, C = h.shape
    assert C == cfg['hidden']
    max_N = int(N.max())

    blocks = params['blocks']
    step = _make_depth_step(blocks, cfg)

    # Static-batch depth loop: every item runs every depth (no host filtering);
    # each item's result is taken from the snapshot at its completion depth.
    h_d = jnp.asarray(h, jnp.float32)[:, :, None]      # (B, C, 1), channels-first
    snaps, Ms = [], []
    depth = 0
    while True:
        dval = jnp.full((1,), math.log1p(depth), jnp.float32)
        h_d = step(h_d, dval)
        snaps.append(h_d)
        Ms.append(int(h_d.shape[-1]))                  # inside Expand, M == T
        if Ms[-1] >= max_N:
            break
        depth += 1

    Ms = np.asarray(Ms)
    done_depth = np.array([int(np.argmax(Ms >= n)) for n in N])
    # Faithful to the PyTorch code: results are collected in completion order
    # while offsets/lengths use N in the ORIGINAL batch order.  For
    # monotonically increasing N (typical use and this demo) the two orders
    # coincide; crops are clamped only to avoid ill-defined negative slices.
    order = np.argsort(done_depth, kind='stable')
    rows = []
    for k in range(B):
        b = int(order[k])
        db = int(done_depth[b])
        Mk = int(Ms[db])
        nk = int(N[k])
        off = (Mk - nk) // 2
        off = max(0, min(off, Mk))
        ln = max(0, min(nk, Mk - off))
        seg = snaps[db][b, :, off:off + ln]
        if ln < max_N:
            seg = jnp.pad(seg, ((0, 0), (0, max_N - ln)))
        rows.append(seg)
    return jnp.stack(rows, axis=0)                     # (B, hidden, max(N))


# ----------------------------------------------------------------------------
# NumPy float64 reference (literal mirror of the PyTorch module) for validation
# ----------------------------------------------------------------------------

def _ref_conv_transpose(x, w, b, stride, padding):
    C_in, L = x.shape
    _, C_out, K = w.shape
    L_out = (L - 1) * stride + K - 2 * padding
    full = np.zeros((C_out, (L - 1) * stride + K), np.float64)
    for t in range(L):
        xt = x[:, t]
        for k in range(K):
            full[:, t * stride + k] += w[:, :, k].T @ xt
    return full[:, padding:padding + L_out] + b[:, None]


def _reference_forward(raw, cfg, h, N):
    C = cfg['hidden']; K = cfg['kernel_size']
    leak = cfg['leak']; use_ln = cfg['layer_norm']; depth_var = cfg['depth_variant']

    def depth_cat(v, depth):
        if not depth_var:
            return v
        return np.concatenate([v, np.full((1, v.shape[1]), math.log1p(depth))], axis=0)

    def norm(v):
        return (v - v.mean()) / np.sqrt(v.var() + 1e-5) if use_ln else v

    def act(v):
        return np.where(v > 0, v, leak * v)

    def block(x, bp, depth):
        p1 = (K - 3) // 2
        p2 = (K - 1) // 2
        lr = _ref_conv_transpose(depth_cat(x, depth), np.asarray(bp['w1'], np.float64),
                                 np.asarray(bp['b1'], np.float64), bp['stride'], p1)
        l, r = lr[:C], lr[C:]
        r = act(norm(r))
        r = _ref_conv_transpose(depth_cat(r, depth), np.asarray(bp['w2'], np.float64),
                                np.asarray(bp['b2'], np.float64), 1, p2)
        return l + act(norm(r))

    N = np.asarray(N, np.int64)
    N_orig = N.copy()
    cur = [np.asarray(h, np.float64)[b][:, None] for b in range(h.shape[0])]
    cur_N = list(N)
    out_h, out_M = [], []
    depth = 0
    while cur:
        nxt, nxt_N = [], []
        for xb, nb in zip(cur, cur_N):
            for bp in raw['blocks']:
                xb = block(xb, bp, depth)
            if xb.shape[1] >= nb:
                out_h.append(xb)
                out_M.append(xb.shape[1])
            else:
                nxt.append(xb)
                nxt_N.append(nb)
        cur, cur_N = nxt, nxt_N
        depth += 1
    offset = (np.asarray(out_M) - N_orig) // 2
    max_N = int(N_orig.max())
    rows = []
    for hi, oi, ni in zip(out_h, offset, N_orig):
        seg = hi[:, int(oi):int(oi) + int(ni)]
        rows.append(np.pad(seg, ((0, 0), (0, max_N - seg.shape[1]))))
    return np.stack(rows, 0)


# ----------------------------------------------------------------------------

if __name__ == "__main__":
    cfg = dict(hidden=8, kernel_size=5, stride=2, layers=2, depth_variant=True,
               stride_on='first', leak=0.1, dropout=0.0, layer_norm=True)

    root = jax.random.PRNGKey(0)
    kp, kh = jax.random.split(root)
    raw_params = init_params(kp, cfg)
    params = prepare_params(raw_params, cfg)

    B = 3
    h = jax.random.normal(kh, (B, cfg['hidden']), jnp.float32)
    N = np.array([5, 9, 13], dtype=np.int32)          # target lengths

    out = expand_forward(params, cfg, h, N)
    out = jax.block_until_ready(out)

    assert out.shape == (B, cfg['hidden'], int(N.max())), out.shape
    assert bool(jnp.all(jnp.isfinite(out)))

    # Numerical check against a literal NumPy float64 mirror of the PyTorch module.
    ref = _reference_forward(raw_params, cfg, np.asarray(h), N)
    np.testing.assert_allclose(np.asarray(out), ref, rtol=1e-3, atol=1e-3)

    print("KERNEL_OK")
</pallas_src>

<mosaic_0001>
module attributes {stable_mosaic.version = 11 : i64} {
  func.func @kernel(%arg0: i32, %arg1: memref<1xf32, #tpu.memory_space<smem>>, %arg2: memref<1x8x1xf32, #tpu.memory_space<vmem>>, %arg3: memref<16x18xf32, #tpu.memory_space<vmem>>, %arg4: memref<16x27xf32, #tpu.memory_space<vmem>>, %arg5: memref<16x1xf32, #tpu.memory_space<vmem>>, %arg6: memref<8x45xf32, #tpu.memory_space<vmem>>, %arg7: memref<8x45xf32, #tpu.memory_space<vmem>>, %arg8: memref<8x1xf32, #tpu.memory_space<vmem>>, %arg9: memref<1x8x2xf32, #tpu.memory_space<vmem>>, %arg10: memref<1x8x1xf32, #tpu.memory_space<vmem>>) attributes {dimension_semantics = [#tpu.dimension_semantics<parallel>], iteration_bounds = array<i64: 3>, scalar_prefetch = 0 : i64, scratch_operands = 0 : i64, tpu.core_type = #tpu.core_type<tc>, window_params = [{transform_indices = @transform_0, window_bounds = array<i64: 1>}, {transform_indices = @transform_1, window_bounds = array<i64: 1, 8, 1>}, {pipeline_mode = #tpu.pipeline_mode<synchronous>, transform_indices = @transform_2, window_bounds = array<i64: 16, 18>}, {pipeline_mode = #tpu.pipeline_mode<synchronous>, transform_indices = @transform_3, window_bounds = array<i64: 16, 27>}, {pipeline_mode = #tpu.pipeline_mode<synchronous>, transform_indices = @transform_4, window_bounds = array<i64: 16, 1>}, {pipeline_mode = #tpu.pipeline_mode<synchronous>, transform_indices = @transform_5, window_bounds = array<i64: 8, 45>}, {pipeline_mode = #tpu.pipeline_mode<synchronous>, transform_indices = @transform_6, window_bounds = array<i64: 8, 45>}, {pipeline_mode = #tpu.pipeline_mode<synchronous>, transform_indices = @transform_7, window_bounds = array<i64: 8, 1>}, {transform_indices = @transform_8, window_bounds = array<i64: 1, 8, 2>}, {transform_indices = @transform_9, window_bounds = array<i64: 1, 8, 1>}]} {
    %c0 = arith.constant 0 : index
    %0 = memref.load %arg1[%c0] : memref<1xf32, #tpu.memory_space<smem>>
    %c0_0 = arith.constant 0 : index
    %c0_1 = arith.constant 0 : index
    %c0_2 = arith.constant 0 : index
    %1 = vector.load %arg2[%c0_0, %c0_1, %c0_2] : memref<1x8x1xf32, #tpu.memory_space<vmem>>, vector<1x8x1xf32>
    %2 = vector.shape_cast %1 : vector<1x8x1xf32> to vector<8x1xf32>
    %cst = arith.constant 1.000000e+00 : f32
    %3 = vector.broadcast %cst : f32 to vector<1x1xf32>
    %4 = vector.broadcast %0 : f32 to vector<1x1xf32>
    %5 = arith.mulf %4, %3 : vector<1x1xf32>
    %6 = tpu.concatenate %2, %5 in 0 : vector<8x1xf32>, vector<1x1xf32> -> vector<9x1xf32>
    %cst_3 = arith.constant 0.000000e+00 : f32
    %7 = vector.broadcast %cst_3 : f32 to vector<9x1xf32>
    %cst_4 = arith.constant 0.000000e+00 : f32
    %8 = vector.broadcast %cst_4 : f32 to vector<9x1xf32>
    %9 = tpu.concatenate %7, %6, %8 in 1 : vector<9x1xf32>, vector<9x1xf32>, vector<9x1xf32> -> vector<9x3xf32>
    %c0_5 = arith.constant 0 : index
    %c0_6 = arith.constant 0 : index
    %10 = vector.load %arg5[%c0_5, %c0_6] : memref<16x1xf32, #tpu.memory_space<vmem>>, vector<16x1xf32>
    %11 = vector.extract_strided_slice %9 {offsets = [0, 1], sizes = [9, 2], strides = [1, 1]} : vector<9x3xf32> to vector<9x2xf32>
    %12 = vector.extract_strided_slice %9 {offsets = [0, 0], sizes = [9, 2], strides = [1, 1]} : vector<9x3xf32> to vector<9x2xf32>
    %13 = tpu.concatenate %11, %12 in 0 : vector<9x2xf32>, vector<9x2xf32> -> vector<18x2xf32>
    %c0_7 = arith.constant 0 : index
    %c0_8 = arith.constant 0 : index
    %14 = vector.load %arg3[%c0_7, %c0_8] : memref<16x18xf32, #tpu.memory_space<vmem>>, vector<16x18xf32>
    %cst_9 = arith.constant dense<0.000000e+00> : vector<16x2xf32>
    %15 = tpu.matmul %14, %13, %cst_9 {dimension_numbers = #tpu.dot_dimension_numbers<[1], [0], [0], [1], [0, 0, 1, 1], [], []>} : vector<16x18xf32>, vector<18x2xf32>, vector<16x2xf32> -> vector<16x2xf32>
    %16 = vector.broadcast %10 : vector<16x1xf32> to vector<16x2xf32>
    %17 = arith.addf %15, %16 : vector<16x2xf32>
    %18 = vector.extract_strided_slice %9 {offsets = [0, 2], sizes = [9, 1], strides = [1, 1]} : vector<9x3xf32> to vector<9x1xf32>
    %19 = vector.extract_strided_slice %9 {offsets = [0, 1], sizes = [9, 1], strides = [1, 1]} : vector<9x3xf32> to vector<9x1xf32>
    %20 = vector.extract_strided_slice %9 {offsets = [0, 0], sizes = [9, 1], strides = [1, 1]} : vector<9x3xf32> to vector<9x1xf32>
    %21 = tpu.concatenate %18, %19, %20 in 0 : vector<9x1xf32>, vector<9x1xf32>, vector<9x1xf32> -> vector<27x1xf32>
    %c0_10 = arith.constant 0 : index
    %c0_11 = arith.constant 0 : index
    %22 = vector.load %arg4[%c0_10, %c0_11] : memref<16x27xf32, #tpu.memory_space<vmem>>, vector<16x27xf32>
    %cst_12 = arith.constant dense<0.000000e+00> : vector<16x1xf32>
    %23 = tpu.matmul %22, %21, %cst_12 {dimension_numbers = #tpu.dot_dimension_numbers<[1], [0], [0], [1], [0, 0, 1, 1], [], []>} : vector<16x27xf32>, vector<27x1xf32>, vector<16x1xf32> -> vector<16x1xf32>
    %24 = arith.addf %23, %10 : vector<16x1xf32>
    %25 = vector.extract_strided_slice %17 {offsets = [0, 0], sizes = [8, 2], strides = [1, 1]} : vector<16x2xf32> to vector<8x2xf32>
    %26 = vector.extract_strided_slice %24 {offsets = [0, 0], sizes = [8, 1], strides = [1, 1]} : vector<16x1xf32> to vector<8x1xf32>
    %27 = vector.extract_strided_slice %17 {offsets = [8, 0], sizes = [8, 2], strides = [1, 1]} : vector<16x2xf32> to vector<8x2xf32>
    %28 = vector.extract_strided_slice %24 {offsets = [8, 0], sizes = [8, 1], strides = [1, 1]} : vector<16x1xf32> to vector<8x1xf32>
    %29 = vector.shape_cast %27 : vector<8x2xf32> to vector<1x8x2xf32>
    %cst_13 = arith.constant dense<0.000000e+00> : vector<1xf32>
    %30 = vector.multi_reduction <add>, %29, %cst_13 [1, 2] : vector<1x8x2xf32> to vector<1xf32>
    %31 = vector.shape_cast %30 : vector<1xf32> to vector<1x1x1xf32>
    %32 = vector.extract %31[0, 0, 0] : f32 from vector<1x1x1xf32>
    %33 = vector.broadcast %32 : f32 to vector<1x1xf32>
    %34 = vector.shape_cast %28 : vector<8x1xf32> to vector<1x8x1xf32>
    %cst_14 = arith.constant dense<0.000000e+00> : vector<1xf32>
    %35 = vector.multi_reduction <add>, %34, %cst_14 [1, 2] : vector<1x8x1xf32> to vector<1xf32>
    %36 = vector.shape_cast %35 : vector<1xf32> to vector<1x1x1xf32>
    %37 = vector.extract %36[0, 0, 0] : f32 from vector<1x1x1xf32>
    %38 = vector.broadcast %37 : f32 to vector<1x1xf32>
    %39 = arith.addf %33, %38 : vector<1x1xf32>
    %cst_15 = arith.constant 2.400000e+01 : f32
    %40 = vector.broadcast %cst_15 : f32 to vector<1x1xf32>
    %41 = arith.divf %39, %40 : vector<1x1xf32>
    %42 = vector.broadcast %41 : vector<1x1xf32> to vector<8x2xf32>
    %43 = arith.subf %27, %42 : vector<8x2xf32>
    %44 = arith.mulf %43, %43 : vector<8x2xf32>
    %45 = vector.shape_cast %44 : vector<8x2xf32> to vector<1x8x2xf32>
    %cst_16 = arith.constant dense<0.000000e+00> : vector<1xf32>
    %46 = vector.multi_reduction <add>, %45, %cst_16 [1, 2] : vector<1x8x2xf32> to vector<1xf32>
    %47 = vector.shape_cast %46 : vector<1xf32> to vector<1x1x1xf32>
    %48 = vector.extract %47[0, 0, 0] : f32 from vector<1x1x1xf32>
    %49 = vector.broadcast %48 : f32 to vector<1x1xf32>
    %50 = vector.broadcast %41 : vector<1x1xf32> to vector<8x1xf32>
    %51 = arith.subf %28, %50 : vector<8x1xf32>
    %52 = arith.mulf %51, %51 : vector<8x1xf32>
    %53 = vector.shape_cast %52 : vector<8x1xf32> to vector<1x8x1xf32>
    %cst_17 = arith.constant dense<0.000000e+00> : vector<1xf32>
    %54 = vector.multi_reduction <add>, %53, %cst_17 [1, 2] : vector<1x8x1xf32> to vector<1xf32>
    %55 = vector.shape_cast %54 : vector<1xf32> to vector<1x1x1xf32>
    %56 = vector.extract %55[0, 0, 0] : f32 from vector<1x1x1xf32>
    %57 = vector.broadcast %56 : f32 to vector<1x1xf32>
    %58 = arith.addf %49, %57 : vector<1x1xf32>
    %cst_18 = arith.constant 2.400000e+01 : f32
    %59 = vector.broadcast %cst_18 : f32 to vector<1x1xf32>
    %60 = arith.divf %58, %59 : vector<1x1xf32>
    %cst_19 = arith.constant 9.99999974E-6 : f32
    %61 = vector.broadcast %cst_19 : f32 to vector<1x1xf32>
    %62 = arith.addf %60, %61 : vector<1x1xf32>
    %63 = math.rsqrt %62 : vector<1x1xf32>
    %64 = vector.broadcast %41 : vector<1x1xf32> to vector<8x2xf32>
    %65 = arith.subf %27, %64 : vector<8x2xf32>
    %66 = vector.broadcast %63 : vector<1x1xf32> to vector<8x2xf32>
    %67 = arith.mulf %65, %66 : vector<8x2xf32>
    %68 = vector.broadcast %41 : vector<1x1xf32> to vector<8x1xf32>
    %69 = arith.subf %28, %68 : vector<8x1xf32>
    %70 = vector.broadcast %63 : vector<1x1xf32> to vector<8x1xf32>
    %71 = arith.mulf %69, %70 : vector<8x1xf32>
    %cst_20 = arith.constant 0.000000e+00 : f32
    %72 = vector.broadcast %cst_20 : f32 to vector<8x2xf32>
    %73 = arith.cmpf ogt, %67, %72 : vector<8x2xf32>
    %cst_21 = arith.constant 1.000000e-01 : f32
    %74 = vector.broadcast %cst_21 : f32 to vector<8x2xf32>
    %75 = arith.mulf %74, %67 : vector<8x2xf32>
    %76 = arith.select %73, %67, %75 : vector<8x2xi1>, vector<8x2xf32>
    %cst_22 = arith.constant 0.000000e+00 : f32
    %77 = vector.broadcast %cst_22 : f32 to vector<8x1xf32>
    %78 = arith.cmpf ogt, %71, %77 : vector<8x1xf32>
    %cst_23 = arith.constant 1.000000e-01 : f32
    %79 = vector.broadcast %cst_23 : f32 to vector<8x1xf32>
    %80 = arith.mulf %79, %71 : vector<8x1xf32>
    %81 = arith.select %78, %71, %80 : vector<8x1xi1>, vector<8x1xf32>
    %cst_24 = arith.constant 1.000000e+00 : f32
    %82 = vector.broadcast %cst_24 : f32 to vector<1x2xf32>
    %83 = vector.broadcast %0 : f32 to vector<1x2xf32>
    %84 = arith.mulf %83, %82 : vector<1x2xf32>
    %85 = tpu.concatenate %76, %84 in 0 : vector<8x2xf32>, vector<1x2xf32> -> vector<9x2xf32>
    %cst_25 = arith.constant 1.000000e+00 : f32
    %86 = vector.broadcast %cst_25 : f32 to vector<1x1xf32>
    %87 = vector.broadcast %0 : f32 to vector<1x1xf32>
    %88 = arith.mulf %87, %86 : vector<1x1xf32>
    %89 = tpu.concatenate %81, %88 in 0 : vector<8x1xf32>, vector<1x1xf32> -> vector<9x1xf32>
    %cst_26 = arith.constant 0.000000e+00 : f32
    %90 = vector.broadcast %cst_26 : f32 to vector<9x1xf32>
    %cst_27 = arith.constant 0.000000e+00 : f32
    %91 = vector.broadcast %cst_27 : f32 to vector<9x1xf32>
    %92 = tpu.concatenate %90, %85, %91 in 1 : vector<9x1xf32>, vector<9x2xf32>, vector<9x1xf32> -> vector<9x4xf32>
    %cst_28 = arith.constant 0.000000e+00 : f32
    %93 = vector.broadcast %cst_28 : f32 to vector<9x1xf32>
    %cst_29 = arith.constant 0.000000e+00 : f32
    %94 = vector.broadcast %cst_29 : f32 to vector<9x1xf32>
    %95 = tpu.concatenate %93, %89, %94 in 1 : vector<9x1xf32>, vector<9x1xf32>, vector<9x1xf32> -> vector<9x3xf32>
    %c0_30 = arith.constant 0 : index
    %c0_31 = arith.constant 0 : index
    %96 = vector.load %arg8[%c0_30, %c0_31] : memref<8x1xf32, #tpu.memory_space<vmem>>, vector<8x1xf32>
    %97 = vector.extract_strided_slice %92 {offsets = [0, 2], sizes = [9, 2], strides = [1, 1]} : vector<9x4xf32> to vector<9x2xf32>
    %98 = vector.extract_strided_slice %92 {offsets = [0, 1], sizes = [9, 2], strides = [1, 1]} : vector<9x4xf32> to vector<9x2xf32>
    %99 = vector.extract_strided_slice %92 {offsets = [0, 0], sizes = [9, 2], strides = [1, 1]} : vector<9x4xf32> to vector<9x2xf32>
    %100 = vector.extract_strided_slice %95 {offsets = [0, 1], sizes = [9, 2], strides = [1, 1]} : vector<9x3xf32> to vector<9x2xf32>
    %101 = vector.extract_strided_slice %95 {offsets = [0, 0], sizes = [9, 2], strides = [1, 1]} : vector<9x3xf32> to vector<9x2xf32>
    %102 = tpu.concatenate %97, %98, %99, %100, %101 in 0 : vector<9x2xf32>, vector<9x2xf32>, vector<9x2xf32>, vector<9x2xf32>, vector<9x2xf32> -> vector<45x2xf32>
    %c0_32 = arith.constant 0 : index
    %c0_33 = arith.constant 0 : index
    %103 = vector.load %arg6[%c0_32, %c0_33] : memref<8x45xf32, #tpu.memory_space<vmem>>, vector<8x45xf32>
    %cst_34 = arith.constant dense<0.000000e+00> : vector<8x2xf32>
    %104 = tpu.matmul %103, %102, %cst_34 {dimension_numbers = #tpu.dot_dimension_numbers<[1], [0], [0], [1], [0, 0, 1, 1], [], []>} : vector<8x45xf32>, vector<45x2xf32>, vector<8x2xf32> -> vector<8x2xf32>
    %105 = vector.broadcast %96 : vector<8x1xf32> to vector<8x2xf32>
    %106 = arith.addf %104, %105 : vector<8x2xf32>
    %107 = vector.extract_strided_slice %92 {offsets = [0, 2], sizes = [9, 1], strides = [1, 1]} : vector<9x4xf32> to vector<9x1xf32>
    %108 = vector.extract_strided_slice %92 {offsets = [0, 1], sizes = [9, 1], strides = [1, 1]} : vector<9x4xf32> to vector<9x1xf32>
    %109 = vector.extract_strided_slice %95 {offsets = [0, 2], sizes = [9, 1], strides = [1, 1]} : vector<9x3xf32> to vector<9x1xf32>
    %110 = vector.extract_strided_slice %95 {offsets = [0, 1], sizes = [9, 1], strides = [1, 1]} : vector<9x3xf32> to vector<9x1xf32>
    %111 = vector.extract_strided_slice %95 {offsets = [0, 0], sizes = [9, 1], strides = [1, 1]} : vector<9x3xf32> to vector<9x1xf32>
    %112 = tpu.concatenate %107, %108, %109, %110, %111 in 0 : vector<9x1xf32>, vector<9x1xf32>, vector<9x1xf32>, vector<9x1xf32>, vector<9x1xf32> -> vector<45x1xf32>
    %c0_35 = arith.constant 0 : index
    %c0_36 = arith.constant 0 : index
    %113 = vector.load %arg7[%c0_35, %c0_36] : memref<8x45xf32, #tpu.memory_space<vmem>>, vector<8x45xf32>
    %cst_37 = arith.constant dense<0.000000e+00> : vector<8x1xf32>
    %114 = tpu.matmul %113, %112, %cst_37 {dimension_numbers = #tpu.dot_dimension_numbers<[1], [0], [0], [1], [0, 0, 1, 1], [], []>} : vector<8x45xf32>, vector<45x1xf32>, vector<8x1xf32> -> vector<8x1xf32>
    %115 = arith.addf %114, %96 : vector<8x1xf32>
    %116 = vector.shape_cast %106 : vector<8x2xf32> to vector<1x8x2xf32>
    %cst_38 = arith.constant dense<0.000000e+00> : vector<1xf32>
    %117 = vector.multi_reduction <add>, %116, %cst_38 [1, 2] : vector<1x8x2xf32> to vector<1xf32>
    %118 = vector.shape_cast %117 : vector<1xf32> to vector<1x1x1xf32>
    %119 = vector.extract %118[0, 0, 0] : f32 from vector<1x1x1xf32>
    %120 = vector.broadcast %119 : f32 to vector<1x1xf32>
    %121 = vector.shape_cast %115 : vector<8x1xf32> to vector<1x8x1xf32>
    %cst_39 = arith.constant dense<0.000000e+00> : vector<1xf32>
    %122 = vector.multi_reduction <add>, %121, %cst_39 [1, 2] : vector<1x8x1xf32> to vector<1xf32>
    %123 = vector.shape_cast %122 : vector<1xf32> to vector<1x1x1xf32>
    %124 = vector.extract %123[0, 0, 0] : f32 from vector<1x1x1xf32>
    %125 = vector.broadcast %124 : f32 to vector<1x1xf32>
    %126 = arith.addf %120, %125 : vector<1x1xf32>
    %cst_40 = arith.constant 2.400000e+01 : f32
    %127 = vector.broadcast %cst_40 : f32 to vector<1x1xf32>
    %128 = arith.divf %126, %127 : vector<1x1xf32>
    %129 = vector.broadcast %128 : vector<1x1xf32> to vector<8x2xf32>
    %130 = arith.subf %106, %129 : vector<8x2xf32>
    %131 = arith.mulf %130, %130 : vector<8x2xf32>
    %132 = vector.shape_cast %131 : vector<8x2xf32> to vector<1x8x2xf32>
    %cst_41 = arith.constant dense<0.000000e+00> : vector<1xf32>
    %133 = vector.multi_reduction <add>, %132, %cst_41 [1, 2] : vector<1x8x2xf32> to vector<1xf32>
    %134 = vector.shape_cast %133 : vector<1xf32> to vector<1x1x1xf32>
    %135 = vector.extract %134[0, 0, 0] : f32 from vector<1x1x1xf32>
    %136 = vector.broadcast %135 : f32 to vector<1x1xf32>
    %137 = vector.broadcast %128 : vector<1x1xf32> to vector<8x1xf32>
    %138 = arith.subf %115, %137 : vector<8x1xf32>
    %139 = arith.mulf %138, %138 : vector<8x1xf32>
    %140 = vector.shape_cast %139 : vector<8x1xf32> to vector<1x8x1xf32>
    %cst_42 = arith.constant dense<0.000000e+00> : vector<1xf32>
    %141 = vector.multi_reduction <add>, %140, %cst_42 [1, 2] : vector<1x8x1xf32> to vector<1xf32>
    %142 = vector.shape_cast %141 : vector<1xf32> to vector<1x1x1xf32>
    %143 = vector.extract %142[0, 0, 0] : f32 from vector<1x1x1xf32>
    %144 = vector.broadcast %143 : f32 to vector<1x1xf32>
    %145 = arith.addf %136, %144 : vector<1x1xf32>
    %cst_43 = arith.constant 2.400000e+01 : f32
    %146 = vector.broadcast %cst_43 : f32 to vector<1x1xf32>
    %147 = arith.divf %145, %146 : vector<1x1xf32>
    %cst_44 = arith.constant 9.99999974E-6 : f32
    %148 = vector.broadcast %cst_44 : f32 to vector<1x1xf32>
    %149 = arith.addf %147, %148 : vector<1x1xf32>
    %150 = math.rsqrt %149 : vector<1x1xf32>
    %151 = vector.broadcast %128 : vector<1x1xf32> to vector<8x2xf32>
    %152 = arith.subf %106, %151 : vector<8x2xf32>
    %153 = vector.broadcast %150 : vector<1x1xf32> to vector<8x2xf32>
    %154 = arith.mulf %152, %153 : vector<8x2xf32>
    %155 = vector.broadcast %128 : vector<1x1xf32> to vector<8x1xf32>
    %156 = arith.subf %115, %155 : vector<8x1xf32>
    %157 = vector.broadcast %150 : vector<1x1xf32> to vector<8x1xf32>
    %158 = arith.mulf %156, %157 : vector<8x1xf32>
    %cst_45 = arith.constant 0.000000e+00 : f32
    %159 = vector.broadcast %cst_45 : f32 to vector<8x2xf32>
    %160 = arith.cmpf ogt, %154, %159 : vector<8x2xf32>
    %cst_46 = arith.constant 1.000000e-01 : f32
    %161 = vector.broadcast %cst_46 : f32 to vector<8x2xf32>
    %162 = arith.mulf %161, %154 : vector<8x2xf32>
    %163 = arith.select %160, %154, %162 : vector<8x2xi1>, vector<8x2xf32>
    %cst_47 = arith.constant 0.000000e+00 : f32
    %164 = vector.broadcast %cst_47 : f32 to vector<8x1xf32>
    %165 = arith.cmpf ogt, %158, %164 : vector<8x1xf32>
    %cst_48 = arith.constant 1.000000e-01 : f32
    %166 = vector.broadcast %cst_48 : f32 to vector<8x1xf32>
    %167 = arith.mulf %166, %158 : vector<8x1xf32>
    %168 = arith.select %165, %158, %167 : vector<8x1xi1>, vector<8x1xf32>
    %169 = arith.addf %25, %163 : vector<8x2xf32>
    %c0_49 = arith.constant 0 : index
    %c0_50 = arith.constant 0 : index
    %c0_51 = arith.constant 0 : index
    %170 = vector.load %arg9[%c0_49, %c0_50, %c0_51] : memref<1x8x2xf32, #tpu.memory_space<vmem>>, vector<1x8x2xf32>
    %171 = vector.shape_cast %170 : vector<1x8x2xf32> to vector<8x2xf32>
    %172 = vector.shape_cast %169 : vector<8x2xf32> to vector<1x8x2xf32>
    tpu.vector_store %arg9[%c0_49, %c0_50, %c0_51], %172 {strides = array<i32>} : memref<1x8x2xf32, #tpu.memory_space<vmem>>, vector<1x8x2xf32>,
    %173 = arith.addf %26, %168 : vector<8x1xf32>
    %c0_52 = arith.constant 0 : index
    %c0_53 = arith.constant 0 : index
    %c0_54 = arith.constant 0 : index
    %174 = vector.load %arg10[%c0_52, %c0_53, %c0_54] : memref<1x8x1xf32, #tpu.memory_space<vmem>>, vector<1x8x1xf32>
    %175 = vector.shape_cast %174 : vector<1x8x1xf32> to vector<8x1xf32>
    %176 = vector.shape_cast %173 : vector<8x1xf32> to vector<1x8x1xf32>
    tpu.vector_store %arg10[%c0_52, %c0_53, %c0_54], %176 {strides = array<i32>} : memref<1x8x1xf32, #tpu.memory_space<vmem>>, vector<1x8x1xf32>,
    return
  }
  func.func @transform_0(%arg0: i32) -> i32 {
    %c0_i32 = arith.constant 0 : i32
    %c0_i32_0 = arith.constant 0 : i32
    return %c0_i32 : i32
  }
  func.func @transform_1(%arg0: i32) -> (i32, i32, i32) {
    %c0_i32 = arith.constant 0 : i32
    %c0_i32_0 = arith.constant 0 : i32
    %c0_i32_1 = arith.constant 0 : i32
    return %arg0, %c0_i32, %c0_i32_0 : i32, i32, i32
  }
  func.func @transform_2(%arg0: i32) -> (i32, i32) {
    %c0_i32 = arith.constant 0 : i32
    %c0_i32_0 = arith.constant 0 : i32
    %c0_i32_1 = arith.constant 0 : i32
    return %c0_i32, %c0_i32_0 : i32, i32
  }
  func.func @transform_3(%arg0: i32) -> (i32, i32) {
    %c0_i32 = arith.constant 0 : i32
    %c0_i32_0 = arith.constant 0 : i32
    %c0_i32_1 = arith.constant 0 : i32
    return %c0_i32, %c0_i32_0 : i32, i32
  }
  func.func @transform_4(%arg0: i32) -> (i32, i32) {
    %c0_i32 = arith.constant 0 : i32
    %c0_i32_0 = arith.constant 0 : i32
    %c0_i32_1 = arith.constant 0 : i32
    return %c0_i32, %c0_i32_0 : i32, i32
  }
  func.func @transform_5(%arg0: i32) -> (i32, i32) {
    %c0_i32 = arith.constant 0 : i32
    %c0_i32_0 = arith.constant 0 : i32
    %c0_i32_1 = arith.constant 0 : i32
    return %c0_i32, %c0_i32_0 : i32, i32
  }
  func.func @transform_6(%arg0: i32) -> (i32, i32) {
    %c0_i32 = arith.constant 0 : i32
    %c0_i32_0 = arith.constant 0 : i32
    %c0_i32_1 = arith.constant 0 : i32
    return %c0_i32, %c0_i32_0 : i32, i32
  }
  func.func @transform_7(%arg0: i32) -> (i32, i32) {
    %c0_i32 = arith.constant 0 : i32
    %c0_i32_0 = arith.constant 0 : i32
    %c0_i32_1 = arith.constant 0 : i32
    return %c0_i32, %c0_i32_0 : i32, i32
  }
  func.func @transform_8(%arg0: i32) -> (i32, i32, i32) {
    %c0_i32 = arith.constant 0 : i32
    %c0_i32_0 = arith.constant 0 : i32
    %c0_i32_1 = arith.constant 0 : i32
    return %arg0, %c0_i32, %c0_i32_0 : i32, i32, i32
  }
  func.func @transform_9(%arg0: i32) -> (i32, i32, i32) {
    %c0_i32 = arith.constant 0 : i32
    %c0_i32_0 = arith.constant 0 : i32
    %c0_i32_1 = arith.constant 0 : i32
    return %arg0, %c0_i32, %c0_i32_0 : i32, i32, i32
  }
}

module attributes {stable_mosaic.version = 11 : i64} {
  func.func @kernel(%arg0: i32, %arg1: memref<1xf32, #tpu.memory_space<smem>>, %arg2: memref<1x8x3xf32, #tpu.memory_space<vmem>>, %arg3: memref<16x45xf32, #tpu.memory_space<vmem>>, %arg4: memref<16x1xf32, #tpu.memory_space<vmem>>, %arg5: memref<8x45xf32, #tpu.memory_space<vmem>>, %arg6: memref<8x1xf32, #tpu.memory_space<vmem>>, %arg7: memref<1x8x5xf32, #tpu.memory_space<vmem>>) attributes {dimension_semantics = [#tpu.dimension_semantics<parallel>], iteration_bounds = array<i64: 3>, scalar_prefetch = 0 : i64, scratch_operands = 0 : i64, tpu.core_type = #tpu.core_type<tc>, window_params = [{transform_indices = @transform_0, window_bounds = array<i64: 1>}, {transform_indices = @transform_1, window_bounds = array<i64: 1, 8, 3>}, {pipeline_mode = #tpu.pipeline_mode<synchronous>, transform_indices = @transform_2, window_bounds = array<i64: 16, 45>}, {pipeline_mode = #tpu.pipeline_mode<synchronous>, transform_indices = @transform_3, window_bounds = array<i64: 16, 1>}, {pipeline_mode = #tpu.pipeline_mode<synchronous>, transform_indices = @transform_4, window_bounds = array<i64: 8, 45>}, {pipeline_mode = #tpu.pipeline_mode<synchronous>, transform_indices = @transform_5, window_bounds = array<i64: 8, 1>}, {transform_indices = @transform_6, window_bounds = array<i64: 1, 8, 5>}]} {
    %c0 = arith.constant 0 : index
    %0 = memref.load %arg1[%c0] : memref<1xf32, #tpu.memory_space<smem>>
    %c0_0 = arith.constant 0 : index
    %c0_1 = arith.constant 0 : index
    %c0_2 = arith.constant 0 : index
    %1 = vector.load %arg2[%c0_0, %c0_1, %c0_2] : memref<1x8x3xf32, #tpu.memory_space<vmem>>, vector<1x8x3xf32>
    %2 = vector.shape_cast %1 : vector<1x8x3xf32> to vector<8x3xf32>
    %cst = arith.constant 1.000000e+00 : f32
    %3 = vector.broadcast %cst : f32 to vector<1x3xf32>
    %4 = vector.broadcast %0 : f32 to vector<1x3xf32>
    %5 = arith.mulf %4, %3 : vector<1x3xf32>
    %6 = tpu.concatenate %2, %5 in 0 : vector<8x3xf32>, vector<1x3xf32> -> vector<9x3xf32>
    %cst_3 = arith.constant 0.000000e+00 : f32
    %7 = vector.broadcast %cst_3 : f32 to vector<9x3xf32>
    %cst_4 = arith.constant 0.000000e+00 : f32
    %8 = vector.broadcast %cst_4 : f32 to vector<9x3xf32>
    %9 = tpu.concatenate %7, %6, %8 in 1 : vector<9x3xf32>, vector<9x3xf32>, vector<9x3xf32> -> vector<9x9xf32>
    %c0_5 = arith.constant 0 : index
    %c0_6 = arith.constant 0 : index
    %10 = vector.load %arg4[%c0_5, %c0_6] : memref<16x1xf32, #tpu.memory_space<vmem>>, vector<16x1xf32>
    %11 = vector.extract_strided_slice %9 {offsets = [0, 4], sizes = [9, 5], strides = [1, 1]} : vector<9x9xf32> to vector<9x5xf32>
    %12 = vector.extract_strided_slice %9 {offsets = [0, 3], sizes = [9, 5], strides = [1, 1]} : vector<9x9xf32> to vector<9x5xf32>
    %13 = vector.extract_strided_slice %9 {offsets = [0, 2], sizes = [9, 5], strides = [1, 1]} : vector<9x9xf32> to vector<9x5xf32>
    %14 = vector.extract_strided_slice %9 {offsets = [0, 1], sizes = [9, 5], strides = [1, 1]} : vector<9x9xf32> to vector<9x5xf32>
    %15 = vector.extract_strided_slice %9 {offsets = [0, 0], sizes = [9, 5], strides = [1, 1]} : vector<9x9xf32> to vector<9x5xf32>
    %16 = tpu.concatenate %11, %12, %13, %14, %15 in 0 : vector<9x5xf32>, vector<9x5xf32>, vector<9x5xf32>, vector<9x5xf32>, vector<9x5xf32> -> vector<45x5xf32>
    %c0_7 = arith.constant 0 : index
    %c0_8 = arith.constant 0 : index
    %17 = vector.load %arg3[%c0_7, %c0_8] : memref<16x45xf32, #tpu.memory_space<vmem>>, vector<16x45xf32>
    %cst_9 = arith.constant dense<0.000000e+00> : vector<16x5xf32>
    %18 = tpu.matmul %17, %16, %cst_9 {dimension_numbers = #tpu.dot_dimension_numbers<[1], [0], [0], [1], [0, 0, 1, 1], [], []>} : vector<16x45xf32>, vector<45x5xf32>, vector<16x5xf32> -> vector<16x5xf32>
    %19 = vector.broadcast %10 : vector<16x1xf32> to vector<16x5xf32>
    %20 = arith.addf %18, %19 : vector<16x5xf32>
    %21 = vector.extract_strided_slice %20 {offsets = [0, 0], sizes = [8, 5], strides = [1, 1]} : vector<16x5xf32> to vector<8x5xf32>
    %22 = vector.extract_strided_slice %20 {offsets = [8, 0], sizes = [8, 5], strides = [1, 1]} : vector<16x5xf32> to vector<8x5xf32>
    %23 = vector.shape_cast %22 : vector<8x5xf32> to vector<1x8x5xf32>
    %cst_10 = arith.constant dense<0.000000e+00> : vector<1xf32>
    %24 = vector.multi_reduction <add>, %23, %cst_10 [1, 2] : vector<1x8x5xf32> to vector<1xf32>
    %25 = vector.shape_cast %24 : vector<1xf32> to vector<1x1x1xf32>
    %26 = vector.extract %25[0, 0, 0] : f32 from vector<1x1x1xf32>
    %27 = vector.broadcast %26 : f32 to vector<1x1xf32>
    %cst_11 = arith.constant 4.000000e+01 : f32
    %28 = vector.broadcast %cst_11 : f32 to vector<1x1xf32>
    %29 = arith.divf %27, %28 : vector<1x1xf32>
    %30 = vector.broadcast %29 : vector<1x1xf32> to vector<8x5xf32>
    %31 = arith.subf %22, %30 : vector<8x5xf32>
    %32 = arith.mulf %31, %31 : vector<8x5xf32>
    %33 = vector.shape_cast %32 : vector<8x5xf32> to vector<1x8x5xf32>
    %cst_12 = arith.constant dense<0.000000e+00> : vector<1xf32>
    %34 = vector.multi_reduction <add>, %33, %cst_12 [1, 2] : vector<1x8x5xf32> to vector<1xf32>
    %35 = vector.shape_cast %34 : vector<1xf32> to vector<1x1x1xf32>
    %36 = vector.extract %35[0, 0, 0] : f32 from vector<1x1x1xf32>
    %37 = vector.broadcast %36 : f32 to vector<1x1xf32>
    %cst_13 = arith.constant 4.000000e+01 : f32
    %38 = vector.broadcast %cst_13 : f32 to vector<1x1xf32>
    %39 = arith.divf %37, %38 : vector<1x1xf32>
    %cst_14 = arith.constant 9.99999974E-6 : f32
    %40 = vector.broadcast %cst_14 : f32 to vector<1x1xf32>
    %41 = arith.addf %39, %40 : vector<1x1xf32>
    %42 = math.rsqrt %41 : vector<1x1xf32>
    %43 = vector.broadcast %29 : vector<1x1xf32> to vector<8x5xf32>
    %44 = arith.subf %22, %43 : vector<8x5xf32>
    %45 = vector.broadcast %42 : vector<1x1xf32> to vector<8x5xf32>
    %46 = arith.mulf %44, %45 : vector<8x5xf32>
    %cst_15 = arith.constant 0.000000e+00 : f32
    %47 = vector.broadcast %cst_15 : f32 to vector<8x5xf32>
    %48 = arith.cmpf ogt, %46, %47 : vector<8x5xf32>
    %cst_16 = arith.constant 1.000000e-01 : f32
    %49 = vector.broadcast %cst_16 : f32 to vector<8x5xf32>
    %50 = arith.mulf %49, %46 : vector<8x5xf32>
    %51 = arith.select %48, %46, %50 : vector<8x5xi1>, vector<8x5xf32>
    %cst_17 = arith.constant 1.000000e+00 : f32
    %52 = vector.broadcast %cst_17 : f32 to vector<1x5xf32>
    %53 = vector.broadcast %0 : f32 to vector<1x5xf32>
    %54 = arith.mulf %53, %52 : vector<1x5xf32>
    %55 = tpu.concatenate %51, %54 in 0 : vector<8x5xf32>, vector<1x5xf32> -> vector<9x5xf32>
    %cst_18 = arith.constant 0.000000e+00 : f32
    %56 = vector.broadcast %cst_18 : f32 to vector<9x2xf32>
    %cst_19 = arith.constant 0.000000e+00 : f32
    %57 = vector.broadcast %cst_19 : f32 to vector<9x2xf32>
    %58 = tpu.concatenate %56, %55, %57 in 1 : vector<9x2xf32>, vector<9x5xf32>, vector<9x2xf32> -> vector<9x9xf32>
    %c0_20 = arith.constant 0 : index
    %c0_21 = arith.constant 0 : index
    %59 = vector.load %arg6[%c0_20, %c0_21] : memref<8x1xf32, #tpu.memory_space<vmem>>, vector<8x1xf32>
    %60 = vector.extract_strided_slice %58 {offsets = [0, 4], sizes = [9, 5], strides = [1, 1]} : vector<9x9xf32> to vector<9x5xf32>
    %61 = vector.extract_strided_slice %58 {offsets = [0, 3], sizes = [9, 5], strides = [1, 1]} : vector<9x9xf32> to vector<9x5xf32>
    %62 = vector.extract_strided_slice %58 {offsets = [0, 2], sizes = [9, 5], strides = [1, 1]} : vector<9x9xf32> to vector<9x5xf32>
    %63 = vector.extract_strided_slice %58 {offsets = [0, 1], sizes = [9, 5], strides = [1, 1]} : vector<9x9xf32> to vector<9x5xf32>
    %64 = vector.extract_strided_slice %58 {offsets = [0, 0], sizes = [9, 5], strides = [1, 1]} : vector<9x9xf32> to vector<9x5xf32>
    %65 = tpu.concatenate %60, %61, %62, %63, %64 in 0 : vector<9x5xf32>, vector<9x5xf32>, vector<9x5xf32>, vector<9x5xf32>, vector<9x5xf32> -> vector<45x5xf32>
    %c0_22 = arith.constant 0 : index
    %c0_23 = arith.constant 0 : index
    %66 = vector.load %arg5[%c0_22, %c0_23] : memref<8x45xf32, #tpu.memory_space<vmem>>, vector<8x45xf32>
    %cst_24 = arith.constant dense<0.000000e+00> : vector<8x5xf32>
    %67 = tpu.matmul %66, %65, %cst_24 {dimension_numbers = #tpu.dot_dimension_numbers<[1], [0], [0], [1], [0, 0, 1, 1], [], []>} : vector<8x45xf32>, vector<45x5xf32>, vector<8x5xf32> -> vector<8x5xf32>
    %68 = vector.broadcast %59 : vector<8x1xf32> to vector<8x5xf32>
    %69 = arith.addf %67, %68 : vector<8x5xf32>
    %70 = vector.shape_cast %69 : vector<8x5xf32> to vector<1x8x5xf32>
    %cst_25 = arith.constant dense<0.000000e+00> : vector<1xf32>
    %71 = vector.multi_reduction <add>, %70, %cst_25 [1, 2] : vector<1x8x5xf32> to vector<1xf32>
    %72 = vector.shape_cast %71 : vector<1xf32> to vector<1x1x1xf32>
    %73 = vector.extract %72[0, 0, 0] : f32 from vector<1x1x1xf32>
    %74 = vector.broadcast %73 : f32 to vector<1x1xf32>
    %cst_26 = arith.constant 4.000000e+01 : f32
    %75 = vector.broadcast %cst_26 : f32 to vector<1x1xf32>
    %76 = arith.divf %74, %75 : vector<1x1xf32>
    %77 = vector.broadcast %76 : vector<1x1xf32> to vector<8x5xf32>
    %78 = arith.subf %69, %77 : vector<8x5xf32>
    %79 = arith.mulf %78, %78 : vector<8x5xf32>
    %80 = vector.shape_cast %79 : vector<8x5xf32> to vector<1x8x5xf32>
    %cst_27 = arith.constant dense<0.000000e+00> : vector<1xf32>
    %81 = vector.multi_reduction <add>, %80, %cst_27 [1, 2] : vector<1x8x5xf32> to vector<1xf32>
    %82 = vector.shape_cast %81 : vector<1xf32> to vector<1x1x1xf32>
    %83 = vector.extract %82[0, 0, 0] : f32 from vector<1x1x1xf32>
    %84 = vector.broadcast %83 : f32 to vector<1x1xf32>
    %cst_28 = arith.constant 4.000000e+01 : f32
    %85 = vector.broadcast %cst_28 : f32 to vector<1x1xf32>
    %86 = arith.divf %84, %85 : vector<1x1xf32>
    %cst_29 = arith.constant 9.99999974E-6 : f32
    %87 = vector.broadcast %cst_29 : f32 to vector<1x1xf32>
    %88 = arith.addf %86, %87 : vector<1x1xf32>
    %89 = math.rsqrt %88 : vector<1x1xf32>
    %90 = vector.broadcast %76 : vector<1x1xf32> to vector<8x5xf32>
    %91 = arith.subf %69, %90 : vector<8x5xf32>
    %92 = vector.broadcast %89 : vector<1x1xf32> to vector<8x5xf32>
    %93 = arith.mulf %91, %92 : vector<8x5xf32>
    %cst_30 = arith.constant 0.000000e+00 : f32
    %94 = vector.broadcast %cst_30 : f32 to vector<8x5xf32>
    %95 = arith.cmpf ogt, %93, %94 : vector<8x5xf32>
    %cst_31 = arith.constant 1.000000e-01 : f32
    %96 = vector.broadcast %cst_31 : f32 to vector<8x5xf32>
    %97 = arith.mulf %96, %93 : vector<8x5xf32>
    %98 = arith.select %95, %93, %97 : vector<8x5xi1>, vector<8x5xf32>
    %99 = arith.addf %21, %98 : vector<8x5xf32>
    %c0_32 = arith.constant 0 : index
    %c0_33 = arith.constant 0 : index
    %c0_34 = arith.constant 0 : index
    %100 = vector.load %arg7[%c0_32, %c0_33, %c0_34] : memref<1x8x5xf32, #tpu.memory_space<vmem>>, vector<1x8x5xf32>
    %101 = vector.shape_cast %100 : vector<1x8x5xf32> to vector<8x5xf32>
    %102 = vector.shape_cast %99 : vector<8x5xf32> to vector<1x8x5xf32>
    tpu.vector_store %arg7[%c0_32, %c0_33, %c0_34], %102 {strides = array<i32>} : memref<1x8x5xf32, #tpu.memory_space<vmem>>, vector<1x8x5xf32>,
    return
  }
  func.func @transform_0(%arg0: i32) -> i32 {
    %c0_i32 = arith.constant 0 : i32
    %c0_i32_0 = arith.constant 0 : i32
    return %c0_i32 : i32
  }
  func.func @transform_1(%arg0: i32) -> (i32, i32, i32) {
    %c0_i32 = arith.constant 0 : i32
    %c0_i32_0 = arith.constant 0 : i32
    %c0_i32_1 = arith.constant 0 : i32
    return %arg0, %c0_i32, %c0_i32_0 : i32, i32, i32
  }
  func.func @transform_2(%arg0: i32) -> (i32, i32) {
    %c0_i32 = arith.constant 0 : i32
    %c0_i32_0 = arith.constant 0 : i32
    %c0_i32_1 = arith.constant 0 : i32
    return %c0_i32, %c0_i32_0 : i32, i32
  }
  func.func @transform_3(%arg0: i32) -> (i32, i32) {
    %c0_i32 = arith.constant 0 : i32
    %c0_i32_0 = arith.constant 0 : i32
    %c0_i32_1 = arith.constant 0 : i32
    return %c0_i32, %c0_i32_0 : i32, i32
  }
  func.func @transform_4(%arg0: i32) -> (i32, i32) {
    %c0_i32 = arith.constant 0 : i32
    %c0_i32_0 = arith.constant 0 : i32
    %c0_i32_1 = arith.constant 0 : i32
    return %c0_i32, %c0_i32_0 : i32, i32
  }
  func.func @transform_5(%arg0: i32) -> (i32, i32) {
    %c0_i32 = arith.constant 0 : i32
    %c0_i32_0 = arith.constant 0 : i32
    %c0_i32_1 = arith.constant 0 : i32
    return %c0_i32, %c0_i32_0 : i32, i32
  }
  func.func @transform_6(%arg0: i32) -> (i32, i32, i32) {
    %c0_i32 = arith.constant 0 : i32
    %c0_i32_0 = arith.constant 0 : i32
    %c0_i32_1 = arith.constant 0 : i32
    return %arg0, %c0_i32, %c0_i32_0 : i32, i32, i32
  }
}

</mosaic_0001>

<llo_original>
// kernel: step.2
$region0: #{step.2}
  #allocation0 [shape = 'u32[]', space=smem, size = 0x4, offset = 0x4, fixed_abs, tag = 'smem constant byte address 0x4 - core index']
  #allocation1 [shape = 'u32[72,128]{1,0:T(1,128)}', space=vmem, size = 0x9000, scoped, tag = 'internal scratch']
  #allocation2 [shape = 'f32[1]{0:T(128)S(6)}', space=smem, size = 0x200, scoped, tag = 'scoped memory for step.2']
  %s0 = inlined_call_operand.<no memory space> [shape: f32[1], index: 0, kind: input, shape index: {}]
  %s1 = inlined_call_operand.vmem [shape: f32[3,8,1], index: 1, kind: input, shape index: {}]
  %s2 = inlined_call_operand.vmem [shape: f32[16,18], index: 2, kind: input, shape index: {}]
  %s3 = inlined_call_operand.vmem [shape: f32[16,27], index: 3, kind: input, shape index: {}]
  %s4 = inlined_call_operand.hbm [shape: f32[16,1], index: 4, kind: input, shape index: {}]
  %s5 = inlined_call_operand.hbm [shape: f32[8,45], index: 5, kind: input, shape index: {}]
  %s6 = inlined_call_operand.hbm [shape: f32[8,45], index: 6, kind: input, shape index: {}]
  %s7 = inlined_call_operand.hbm [shape: f32[8,1], index: 7, kind: input, shape index: {}]
  %s8 = inlined_call_operand.vmem [shape: f32[3,8,2], index: 8, kind: output, shape index: {0}]
  %s9 = inlined_call_operand.vmem [shape: f32[3,8,1], index: 9, kind: output, shape index: {1}]
  %10 = xla_tuple %s8, %s9
  %s11 = sld [smem:[#allocation0]]
  $region89: #{step.2} parent=0
    _
  %s13 = ssub.s32 1, %s11
  %s14 = scalar_select 0, %s13, %s11
  %15 = sst [smem:[#allocation2]] %s0
  $region1: #{step.2} parent=0
    #allocation3 [shape = 'u8[8192]{0}', space=vmem, size = 0x2000, scoped, tag = 'input window, operand 4, single buffered']
    #allocation4 [shape = 's32[2]{0}', space=sflag, size = 0x8, scoped, tag = 'scoped memory for step.2']
    #allocation5 [shape = 'u8[4096]{0}', space=vmem, size = 0x1000, scoped, tag = 'input window, operand 5, single buffered']
    #allocation6 [shape = 's32[1]{0}', space=sflag, size = 0x4, scoped, tag = 'scoped memory for step.2']
    #allocation7 [shape = 'u8[4096]{0}', space=vmem, size = 0x1000, scoped, tag = 'input window, operand 6, single buffered']
    #allocation8 [shape = 'u8[4096]{0}', space=vmem, size = 0x1000, scoped, tag = 'input window, operand 7, single buffered']
    #allocation9 [shape = 's32[1]{0}', space=sflag, size = 0x4, scoped, tag = 'scoped memory for step.2']
    %16 = vsyncpa [#allocation4], 0
    %17 = vsyncpa [#allocation6], 0
    %18 = vsyncpa [#allocation9], 0
    loop: start=0, step=1, limit=5
    $region2: #{step.2} parent=1 // loop_pre_header
      _
    $region3: #{step.2} parent=1 // loop_header
      %s20 = sphi 0, %s24
      %p21 = scmp.ge.s32.totalorder %s20, 5
      %s28 = sphi 0, %s28
      %s30 = sphi 0, %s28
      %s31 = sphi 0, %s30
      %s45 = sphi 0, %s31
      %s51 = sphi 0, %s53
      %s54 = sphi 0, %s51
      %s55 = sphi 0, %s54
      %s71 = sphi 0, %s55
      %s75 = sphi 0, %s75
      %s77 = sphi 0, %s75
      %s78 = sphi 0, %s77
      %s92 = sphi 0, %s78
      %s96 = sphi 0, %s96
      %s98 = sphi 0, %s96
      %s99 = sphi 0, %s98
      %s113 = sphi 0, %s99
      %s117 = sphi 0, %s117
      %s119 = sphi 0, %s117
      %s120 = sphi 0, %s119
      %s134 = sphi 0, %s120
      %s138 = sphi 0, %s138
      %s140 = sphi 0, %s138
      %s141 = sphi 0, %s140
      %s155 = sphi 0, %s141
      %s159 = sphi 0, %s159
      %s161 = sphi 0, %s159
      %s162 = sphi 0, %s161
      %s176 = sphi 0, %s162
      %s180 = sphi 0, %s180
      %s182 = sphi 0, %s180
      %s183 = sphi 0, %s182
      %s197 = sphi 0, %s183
      %s203 = sphi 0, %s205
      %s206 = sphi 0, %s203
      %s207 = sphi 0, %s206
      %s223 = sphi 0, %s207
      %s229 = sphi 0, %s231
      %s232 = sphi 0, %s229
      %s233 = sphi 0, %s232
      %s249 = sphi 0, %s233
    $region4: #{step.2} parent=1 // loop_header_branch
      %23 = sbr.rel (%p21) target = $region8
    $region5: #{step.2} parent=1 // loop_body
      %s25 = ssub.s32 %s20, 1
      %s26 = ssub.s32 %s20, 2
      %s27 = sadd.s32 %s20, 1
      %s29 = sadd.s32 %s28, 1
      %p32 = scmp.eq.s32.totalorder %s20, 2
      %p33 = scmp.ne.s32.totalorder %s28, %s30
      %p34 = scmp.eq.s32.totalorder %s20, 0
      %p35 = por %p33, %p34
      %p36 = scmp.ne.s32.totalorder %s28, %s30
      %p37 = scmp.eq.s32.totalorder %s25, 2
      %p38 = por %p36, %p37
      %p39 = scmp.ne.s32.totalorder %s30, %s31
      %p40 = scmp.eq.s32.totalorder %s25, 0
      %p41 = por %p39, %p40
      %p42 = scmp.ne.s32.totalorder %s30, %s31
      %p43 = scmp.eq.s32.totalorder %s26, 2
      %p44 = por %p42, %p43
      %p46 = scmp.ne.s32.totalorder %s31, %s45
      %p47 = scmp.eq.s32.totalorder %s26, 0
      %p48 = por %p46, %p47
      %s49 = ssub.s32 %s20, %s27
      %p50 = scmp.eq.s32.totalorder %s49, 0
      %s52 = sadd.s32 %s51, 1
      %s53 = scalar_select %p50, %s51, %s52
      %p56 = pneg %p50
      %p57 = scmp.eq.s32.totalorder %s20, 2
      %p58 = por %p56, %p57
      %p59 = scmp.ne.s32.totalorder %s51, %s54
      %p60 = scmp.eq.s32.totalorder %s20, 0
      %p61 = por %p59, %p60
      %p62 = scmp.ne.s32.totalorder %s51, %s54
      %p63 = scmp.eq.s32.totalorder %s25, 2
      %p64 = por %p62, %p63
      %p65 = scmp.ne.s32.totalorder %s54, %s55
      %p66 = scmp.eq.s32.totalorder %s25, 0
      %p67 = por %p65, %p66
      %p68 = scmp.ne.s32.totalorder %s54, %s55
      %p69 = scmp.eq.s32.totalorder %s26, 2
      %p70 = por %p68, %p69
      %p72 = scmp.ne.s32.totalorder %s55, %s71
      %p73 = scmp.eq.s32.totalorder %s26, 0
      %p74 = por %p72, %p73
      %s76 = sadd.s32 %s75, 1
      %p79 = scmp.eq.s32.totalorder %s20, 2
      %p80 = scmp.ne.s32.totalorder %s75, %s77
      %p81 = scmp.eq.s32.totalorder %s20, 0
      %p82 = por %p80, %p81
      %p83 = scmp.ne.s32.totalorder %s75, %s77
      %p84 = scmp.eq.s32.totalorder %s25, 2
      %p85 = por %p83, %p84
      %p86 = scmp.ne.s32.totalorder %s77, %s78
      %p87 = scmp.eq.s32.totalorder %s25, 0
      %p88 = por %p86, %p87
      %p89 = scmp.ne.s32.totalorder %s77, %s78
      %p90 = scmp.eq.s32.totalorder %s26, 2
      %p91 = por %p89, %p90
      %p93 = scmp.ne.s32.totalorder %s78, %s92
      %p94 = scmp.eq.s32.totalorder %s26, 0
      %p95 = por %p93, %p94
      %s97 = sadd.s32 %s96, 1
      %p100 = scmp.eq.s32.totalorder %s20, 2
      %p101 = scmp.ne.s32.totalorder %s96, %s98
      %p102 = scmp.eq.s32.totalorder %s20, 0
      %p103 = por %p101, %p102
      %p104 = scmp.ne.s32.totalorder %s96, %s98
      %p105 = scmp.eq.s32.totalorder %s25, 2
      %p106 = por %p104, %p105
      %p107 = scmp.ne.s32.totalorder %s98, %s99
      %p108 = scmp.eq.s32.totalorder %s25, 0
      %p109 = por %p107, %p108
      %p110 = scmp.ne.s32.totalorder %s98, %s99
      %p111 = scmp.eq.s32.totalorder %s26, 2
      %p112 = por %p110, %p111
      %p114 = scmp.ne.s32.totalorder %s99, %s113
      %p115 = scmp.eq.s32.totalorder %s26, 0
      %p116 = por %p114, %p115
      %s118 = sadd.s32 %s117, 1
      %p121 = scmp.eq.s32.totalorder %s20, 2
      %p122 = scmp.ne.s32.totalorder %s117, %s119
      %p123 = scmp.eq.s32.totalorder %s20, 0
      %p124 = por %p122, %p123
      %p125 = scmp.ne.s32.totalorder %s117, %s119
      %p126 = scmp.eq.s32.totalorder %s25, 2
      %p127 = por %p125, %p126
      %p128 = scmp.ne.s32.totalorder %s119, %s120
      %p129 = scmp.eq.s32.totalorder %s25, 0
      %p130 = por %p128, %p129
      %p131 = scmp.ne.s32.totalorder %s119, %s120
      %p132 = scmp.eq.s32.totalorder %s26, 2
      %p133 = por %p131, %p132
      %p135 = scmp.ne.s32.totalorder %s120, %s134
      %p136 = scmp.eq.s32.totalorder %s26, 0
      %p137 = por %p135, %p136
      %s139 = sadd.s32 %s138, 1
      %p142 = scmp.eq.s32.totalorder %s20, 2
      %p143 = scmp.ne.s32.totalorder %s138, %s140
      %p144 = scmp.eq.s32.totalorder %s20, 0
      %p145 = por %p143, %p144
      %p146 = scmp.ne.s32.totalorder %s138, %s140
      %p147 = scmp.eq.s32.totalorder %s25, 2
      %p148 = por %p146, %p147
      %p149 = scmp.ne.s32.totalorder %s140, %s141
      %p150 = scmp.eq.s32.totalorder %s25, 0
      %p151 = por %p149, %p150
      %p152 = scmp.ne.s32.totalorder %s140, %s141
      %p153 = scmp.eq.s32.totalorder %s26, 2
      %p154 = por %p152, %p153
      %p156 = scmp.ne.s32.totalorder %s141, %s155
      %p157 = scmp.eq.s32.totalorder %s26, 0
      %p158 = por %p156, %p157
      %s160 = sadd.s32 %s159, 1
      %p163 = scmp.eq.s32.totalorder %s20, 2
      %p164 = scmp.ne.s32.totalorder %s159, %s161
      %p165 = scmp.eq.s32.totalorder %s20, 0
      %p166 = por %p164, %p165
      %p167 = scmp.ne.s32.totalorder %s159, %s161
      %p168 = scmp.eq.s32.totalorder %s25, 2
      %p169 = por %p167, %p168
      %p170 = scmp.ne.s32.totalorder %s161, %s162
      %p171 = scmp.eq.s32.totalorder %s25, 0
      %p172 = por %p170, %p171
      %p173 = scmp.ne.s32.totalorder %s161, %s162
      %p174 = scmp.eq.s32.totalorder %s26, 2
      %p175 = por %p173, %p174
      %p177 = scmp.ne.s32.totalorder %s162, %s176
      %p178 = scmp.eq.s32.totalorder %s26, 0
      %p179 = por %p177, %p178
      %s181 = sadd.s32 %s180, 1
      %p184 = scmp.eq.s32.totalorder %s20, 2
      %p185 = scmp.ne.s32.totalorder %s180, %s182
      %p186 = scmp.eq.s32.totalorder %s20, 0
      %p187 = por %p185, %p186
      %p188 = scmp.ne.s32.totalorder %s180, %s182
      %p189 = scmp.eq.s32.totalorder %s25, 2
      %p190 = por %p188, %p189
      %p191 = scmp.ne.s32.totalorder %s182, %s183
      %p192 = scmp.eq.s32.totalorder %s25, 0
      %p193 = por %p191, %p192
      %p194 = scmp.ne.s32.totalorder %s182, %s183
      %p195 = scmp.eq.s32.totalorder %s26, 2
      %p196 = por %p194, %p195
      %p198 = scmp.ne.s32.totalorder %s183, %s197
      %p199 = scmp.eq.s32.totalorder %s26, 0
      %p200 = por %p198, %p199
      %s201 = ssub.s32 %s20, %s27
      %p202 = scmp.eq.s32.totalorder %s201, 0
      %s204 = sadd.s32 %s203, 1
      %s205 = scalar_select %p202, %s203, %s204
      %p208 = pneg %p202
      %p209 = scmp.eq.s32.totalorder %s20, 2
      %p210 = por %p208, %p209
      %p211 = scmp.ne.s32.totalorder %s203, %s206
      %p212 = scmp.eq.s32.totalorder %s20, 0
      %p213 = por %p211, %p212
      %p214 = scmp.ne.s32.totalorder %s203, %s206
      %p215 = scmp.eq.s32.totalorder %s25, 2
      %p216 = por %p214, %p215
      %p217 = scmp.ne.s32.totalorder %s206, %s207
      %p218 = scmp.eq.s32.totalorder %s25, 0
      %p219 = por %p217, %p218
      %p220 = scmp.ne.s32.totalorder %s206, %s207
      %p221 = scmp.eq.s32.totalorder %s26, 2
      %p222 = por %p220, %p221
      %p224 = scmp.ne.s32.totalorder %s207, %s223
      %p225 = scmp.eq.s32.totalorder %s26, 0
      %p226 = por %p224, %p225
      %s227 = ssub.s32 %s20, %s27
      %p228 = scmp.eq.s32.totalorder %s227, 0
      %s230 = sadd.s32 %s229, 1
      %s231 = scalar_select %p228, %s229, %s230
      %p234 = pneg %p228
      %p235 = scmp.eq.s32.totalorder %s20, 2
      %p236 = por %p234, %p235
      %p237 = scmp.ne.s32.totalorder %s229, %s232
      %p238 = scmp.eq.s32.totalorder %s20, 0
      %p239 = por %p237, %p238
      %p240 = scmp.ne.s32.totalorder %s229, %s232
      %p241 = scmp.eq.s32.totalorder %s25, 2
      %p242 = por %p240, %p241
      %p243 = scmp.ne.s32.totalorder %s232, %s233
      %p244 = scmp.eq.s32.totalorder %s25, 0
      %p245 = por %p243, %p244
      %p246 = scmp.ne.s32.totalorder %s232, %s233
      %p247 = scmp.eq.s32.totalorder %s26, 2
      %p248 = por %p246, %p247
      %p250 = scmp.ne.s32.totalorder %s233, %s249
      %p251 = scmp.eq.s32.totalorder %s26, 0
      %p252 = por %p250, %p251
      %p253 = scmp.le.s32.totalorder 1, %s20
      %p254 = scmp.lt.s32.totalorder %s20, 4
      %p255 = pnand %p253, %p254
      %p256 = pneg %p255
      // Predicated region
      $region9: #{step.2} parent=5 // pred_check
        _
      $region10: #{step.2} parent=5 // pred_check_branch
        %258 = sbr.rel (%p255) target = $region12
      $region11: #{step.2} parent=5 // pred_region
        %s259 = ssub.s32 %s20, 1
        // Predicated region
        $region13: #{step.2} parent=11 // pred_check
          %p260 = pneg %p41
        $region14: #{step.2} parent=11 // pred_check_branch
          %262 = sbr.rel (%p260) target = $region16
        $region15: #{step.2} parent=11 // pred_region
          _
        $region16: #{step.2} parent=11 // pred_fallthru
          _
        // Predicated region
        $region17: #{step.2} parent=11 // pred_check
          %p263 = pneg %p88
        $region18: #{step.2} parent=11 // pred_check_branch
          %265 = sbr.rel (%p263) target = $region20
        $region19: #{step.2} parent=11 // pred_region
          _
        $region20: #{step.2} parent=11 // pred_fallthru
          _
        // Predicated region
        $region21: #{step.2} parent=11 // pred_check
          %p266 = pneg %p109
        $region22: #{step.2} parent=11 // pred_check_branch
          %268 = sbr.rel (%p266) target = $region24
        $region23: #{step.2} parent=11 // pred_region
          _
        $region24: #{step.2} parent=11 // pred_fallthru
          _
        // Predicated region
        $region25: #{step.2} parent=11 // pred_check
          %p269 = pneg %p130
        $region26: #{step.2} parent=11 // pred_check_branch
          %271 = sbr.rel (%p269) target = $region28
        $region27: #{step.2} parent=11 // pred_region
          %273 = vsyncadd [#allocation4], 0
          %s274 = sshll.u32 %s4, 4
          %s275 = int_to_ptr.hbm [resolvable:$true] %s274
          %s276 = sshll.u32 [#allocation3], 4
          %s277 = int_to_ptr.vmem [resolvable:$true] %s276
          %282 = dma.hbm_to_vmem [thread:$0]  %s275, 256, %s277, [#allocation4], 128, 128, 8
        $region28: #{step.2} parent=11 // pred_fallthru
          _
        // Predicated region
        $region29: #{step.2} parent=11 // pred_check
          %p283 = pneg %p151
        $region30: #{step.2} parent=11 // pred_check_branch
          %285 = sbr.rel (%p283) target = $region32
        $region31: #{step.2} parent=11 // pred_region
          %287 = vsyncadd [#allocation6], 0
          %s289 = sshll.u32 %s5, 4
          %s290 = int_to_ptr.hbm [resolvable:$true] %s289
          %s291 = sshll.u32 [#allocation5], 4
          %s292 = int_to_ptr.vmem [resolvable:$true] %s291
          %294 = dma.hbm_to_vmem [thread:$0]  %s290, 128, %s292, [#allocation6]
        $region32: #{step.2} parent=11 // pred_fallthru
          _
        // Predicated region
        $region33: #{step.2} parent=11 // pred_check
          %p295 = pneg %p172
        $region34: #{step.2} parent=11 // pred_check_branch
          %297 = sbr.rel (%p295) target = $region36
        $region35: #{step.2} parent=11 // pred_region
          %299 = vsyncadd [#allocation6], 0
          %s301 = sshll.u32 %s6, 4
          %s302 = int_to_ptr.hbm [resolvable:$true] %s301
          %s303 = sshll.u32 [#allocation7], 4
          %s304 = int_to_ptr.vmem [resolvable:$true] %s303
          %306 = dma.hbm_to_vmem [thread:$0]  %s302, 128, %s304, [#allocation6]
        $region36: #{step.2} parent=11 // pred_fallthru
          _
        // Predicated region
        $region37: #{step.2} parent=11 // pred_check
          %p307 = pneg %p193
        $region38: #{step.2} parent=11 // pred_check_branch
          %309 = sbr.rel (%p307) target = $region40
        $region39: #{step.2} parent=11 // pred_region
          %311 = vsyncadd [#allocation9], 0
          %s313 = sshll.u32 %s7, 4
          %s314 = int_to_ptr.hbm [resolvable:$true] %s313
          %s315 = sshll.u32 [#allocation8], 4
          %s316 = int_to_ptr.vmem [resolvable:$true] %s315
          %318 = dma.hbm_to_vmem [thread:$0]  %s314, 128, %s316, [#allocation9]
        $region40: #{step.2} parent=11 // pred_fallthru
          _
      $region12: #{step.2} parent=5 // pred_fallthru
        _
      %p319 = scmp.lt.s32.totalorder %s20, 3
      // Predicated region
      $region41: #{step.2} parent=5 // pred_check
        %p320 = pneg %p319
      $region42: #{step.2} parent=5 // pred_check_branch
        %322 = sbr.rel (%p320) target = $region44
      $region43: #{step.2} parent=5 // pred_region
        // Predicated region
        $region45: #{step.2} parent=43 // pred_check
          %p323 = pneg %p61
        $region46: #{step.2} parent=43 // pred_check_branch
          %325 = sbr.rel (%p323) target = $region48
        $region47: #{step.2} parent=43 // pred_region
          %p326 = scmp.lt.s32.totalorder %s20, 2
          %s327 = scalar_select %p326, %s20, 2
          %s328 = smul.addr %s327, 8
          %s329 = scalar_lea.vmem %s1, %s328
        $region48: #{step.2} parent=43 // pred_fallthru
          _
      $region44: #{step.2} parent=5 // pred_fallthru
        _
      %p330 = scmp.le.s32.totalorder 1, %s20
      %p331 = scmp.lt.s32.totalorder %s20, 4
      %p332 = pnand %p330, %p331
      %p333 = pneg %p332
      // Predicated region
      $region49: #{step.2} parent=5 // pred_check
        _
      $region50: #{step.2} parent=5 // pred_check_branch
        %335 = sbr.rel (%p332) target = $region52
      $region51: #{step.2} parent=5 // pred_region
        %s336 = ssub.s32 %s20, 1
        // Predicated region
        $region53: #{step.2} parent=51 // pred_check
          %p337 = pneg %p130
        $region54: #{step.2} parent=51 // pred_check_branch
          %339 = sbr.rel (%p337) target = $region56
        $region55: #{step.2} parent=51 // pred_region
          %341 = dma.done [#allocation4], 256
        $region56: #{step.2} parent=51 // pred_fallthru
          _
        // Predicated region
        $region57: #{step.2} parent=51 // pred_check
          %p342 = pneg %p151
        $region58: #{step.2} parent=51 // pred_check_branch
          %344 = sbr.rel (%p342) target = $region60
        $region59: #{step.2} parent=51 // pred_region
          %346 = dma.done [#allocation6], 128
        $region60: #{step.2} parent=51 // pred_fallthru
          _
        // Predicated region
        $region61: #{step.2} parent=51 // pred_check
          %p347 = pneg %p172
        $region62: #{step.2} parent=51 // pred_check_branch
          %349 = sbr.rel (%p347) target = $region64
        $region63: #{step.2} parent=51 // pred_region
          %351 = dma.done [#allocation6], 128
        $region64: #{step.2} parent=51 // pred_fallthru
          _
        // Predicated region
        $region65: #{step.2} parent=51 // pred_check
          %p352 = pneg %p193
        $region66: #{step.2} parent=51 // pred_check_branch
          %354 = sbr.rel (%p352) target = $region68
        $region67: #{step.2} parent=51 // pred_region
          %356 = dma.done [#allocation9], 128
        $region68: #{step.2} parent=51 // pred_fallthru
          _
        %p357 = pneg %p41
        %p358 = pneg %p38
        %p359 = scmp.lt.s32.totalorder %s25, 2
        %s360 = scalar_select %p359, %s25, 2
        %s361 = smul.addr %s360, 8
        %s362 = scalar_lea.vmem %s1, %s361
        %p363 = pneg %p67
        %p364 = pneg %p64
        %p365 = pneg %p88
        %p366 = pneg %p85
        %p367 = pneg %p109
        %p368 = pneg %p106
        %p369 = pneg %p130
        %p370 = pneg %p127
        %p371 = pneg %p151
        %p372 = pneg %p148
        %p373 = pneg %p172
        %p374 = pneg %p169
        %p375 = pneg %p193
        %p376 = pneg %p190
        %p377 = pneg %p219
        %p378 = pneg %p216
        %p379 = scmp.lt.s32.totalorder %s25, 2
        %s380 = scalar_select %p379, %s25, 2
        %s381 = smul.addr %s380, 8
        %s382 = scalar_lea.vmem %s8, %s381
        %p383 = pneg %p245
        %p384 = pneg %p242
        %p385 = scmp.lt.s32.totalorder %s25, 2
        %s386 = scalar_select %p385, %s25, 2
        %s387 = smul.addr %s386, 8
        %s388 = scalar_lea.vmem %s9, %s387
        %p389 = scmp.lt.s32.totalorder %s25, 2
        %s390 = scalar_select %p389, %s25, 2
        %s391 = smul.addr %s390, 8
        %s392 = scalar_lea.vmem %s1, %s391
        %p393 = scmp.lt.s32.totalorder %s25, 2
        %s394 = scalar_select %p393, %s25, 2
        %s395 = smul.addr %s394, 8
        %s396 = scalar_lea.vmem %s8, %s395
        %p397 = scmp.lt.s32.totalorder %s25, 2
        %s398 = scalar_select %p397, %s25, 2
        %s399 = smul.addr %s398, 8
        %s400 = scalar_lea.vmem %s9, %s399
        %s401 = sld [smem:[#allocation2]]
        %v402 = vld [vmem:[%s392] sm:$0xff]
        %v403 = vstv %s401
        %406 = vrot.lane.b32.xlu0 %v402, 1
        %v407 = vpop.permute.xlu0 %406
        %408 = vrot.lane.b32.xlu0 %v403, 1
        %v409 = vpop.permute.xlu0 %408
        %vm412 = vcmask 7168
        %v413 = vsel %vm412, 0.0, %v407
        %v414 = vsel %vm412, 0.0, %v409
        %vm415 = vcmask 15360
        %v416 = vsel %vm415, %v413, 0.0
        %v417 = vsel %vm415, %v414, 0.0
        %v418 = vld [vmem:[#allocation3] sm:$0xff]
        %v419 = vld [vmem:[#allocation3 + $0x8] sm:$0xff]
        %vm422 = vcmask 1040384
        %v423 = vrot.slane %v416, 7
        %v424 = vrot.slane %v417, 7
        %v425 = vsel %vm422, %v423, %v424
        %426 = vrot.lane.b32.xlu0 %v423, 1
        %v427 = vpop.permute.xlu0 %426
        %428 = vrot.lane.b32.xlu0 %v425, 1
        %v429 = vpop.permute.xlu0 %428
        %v431 = vsel %vm422, %v417, %v427
        %v432 = vld [vmem:[%s2] sm:$0xff]
        %v433 = vld [vmem:[%s2 + $0x8] sm:$0xff]
        %435 = vset.pattern.permute.xlu0 0
        %436 = vperm.xlu0 %435, %v418
        %v437 = vpop.permute.xlu0 %436
        %440 = vset.pattern.permute.xlu0 0
        %441 = vperm.xlu0 %440, %v419
        %v442 = vpop.permute.xlu0 %441
        %445 = vrot.lane.b32.xlu0 %v416, 127
        %v446 = vpop.permute.xlu0 %445
        %447 = vrot.lane.b32.xlu0 %v431, 127
        %v448 = vpop.permute.xlu0 %447
        %449 = vrot.lane.b32.xlu0 %v429, 127
        %v450 = vpop.permute.xlu0 %449
        %vm453 = vcmask 146432
        %v455 = vsel %vm453, %v432, 0
        %v458 = vsel %vm453, %v433, 0
        %vm460 = vcmask 1041408
        %v461 = vsel %vm460, %v450, 0
        %463 = vmatpush.msra.mxu0 0.0
        %464 = vmatpush.msra.mxu0 0.0
        %465 = vmatpush.msra.mxu0 0.0
        %466 = vmatpush.msra.mxu0 0.0
        %467 = vmatpush.msra.mxu0 0.0
        %468 = vmatpush.msra.mxu0 0.0
        %469 = vmatpush.msra.mxu0 0.0
        %470 = vmatpush.msra.mxu0 0.0
        %471 = vmatpush.msra.mxu0 0.0
        %472 = vmatpush.msra.mxu0 0.0
        %473 = vmatpush.msra.mxu0 0.0
        %474 = vmatpush.msra.mxu0 0.0
        %475 = vmatpush.msra.mxu0 0.0
        %476 = vmatpush.msra.mxu0 %v461
        %477 = vmatpush.msra.mxu0 %v448
        %478 = vmatpush.msra.mxu0 %v446
        %479 = vmatmul.f32.gmra.mxu0 %v455
        %v480 = vpop.f32.mrf.mxu0
        %v481 = vadd.f32 %v437, %v480
        %482 = vmatmul.f32.gmra.mxu0 %v458
        %v483 = vpop.f32.mrf.mxu0
        %v484 = vadd.f32 %v442, %v483
        %485 = vdwg.mxu0
        %v487 = vrot.slane %v416, 6
        %v488 = vrot.slane %v417, 6
        %v489 = vsel %vm460, %v487, %v488
        %490 = vrot.lane.b32.xlu0 %v487, 2
        %v491 = vpop.permute.xlu0 %490
        %492 = vrot.lane.b32.xlu0 %v489, 2
        %v493 = vpop.permute.xlu0 %492
        %v495 = vsel %vm460, %v429, %v491
        %v496 = vld [vmem:[%s3] sm:$0xff]
        %v497 = vld [vmem:[%s3 + $0x8] sm:$0xff]
        %499 = vrot.lane.b32.xlu0 %v416, 126
        %v500 = vpop.permute.xlu0 %499
        %501 = vrot.lane.b32.xlu0 %v431, 126
        %v502 = vpop.permute.xlu0 %501
        %503 = vrot.lane.b32.xlu0 %v495, 126
        %v504 = vpop.permute.xlu0 %503
        %505 = vrot.lane.b32.xlu0 %v493, 126
        %v506 = vpop.permute.xlu0 %505
        %vm510 = vcmask 220160
        %v512 = vsel %vm510, %v496, 0
        %v515 = vsel %vm510, %v497, 0
        %vm517 = vcmask 1042432
        %v518 = vsel %vm517, %v506, 0
        %520 = vmatpush.msra.mxu0 0.0
        %521 = vmatpush.msra.mxu0 0.0
        %522 = vmatpush.msra.mxu0 0.0
        %523 = vmatpush.msra.mxu0 0.0
        %524 = vmatpush.msra.mxu0 0.0
        %525 = vmatpush.msra.mxu0 0.0
        %526 = vmatpush.msra.mxu0 0.0
        %527 = vmatpush.msra.mxu0 0.0
        %528 = vmatpush.msra.mxu0 0.0
        %529 = vmatpush.msra.mxu0 0.0
        %530 = vmatpush.msra.mxu0 0.0
        %531 = vmatpush.msra.mxu0 0.0
        %532 = vmatpush.msra.mxu0 %v518
        %533 = vmatpush.msra.mxu0 %v504
        %534 = vmatpush.msra.mxu0 %v502
        %535 = vmatpush.msra.mxu0 %v500
        %536 = vmatmul.f32.gmra.mxu0 %v512
        %v537 = vpop.f32.mrf.mxu0
        %v538 = vadd.f32 %v418, %v537
        %539 = vmatmul.f32.gmra.mxu0 %v515
        %v540 = vpop.f32.mrf.mxu0
        %v541 = vadd.f32 %v419, %v540
        %542 = vdwg.mxu0
        %v543 = vsel %vm415, %v484, 0.0
        %544 = vadd.xlane.f32.xlu0 %v543
        %v545 = vpop.xlane.xlu0 %544
        %v546 = vrot.slane %v545, 4
        %v547 = vadd.f32 %v545, %v546
        %v548 = vrot.slane %v547, 2
        %v549 = vadd.f32 %v547, %v548
        %v550 = vrot.slane %v549, 1
        %v551 = vadd.f32 %v549, %v550
        %s552 = vtos %v551
        %v553 = vstv %s552
        %v554 = vsel %vm412, %v541, 0.0
        %555 = vadd.xlane.f32.xlu0 %v554
        %v556 = vpop.xlane.xlu0 %555
        %v557 = vrot.slane %v556, 4
        %v558 = vadd.f32 %v556, %v557
        %v559 = vrot.slane %v558, 2
        %v560 = vadd.f32 %v558, %v559
        %v561 = vrot.slane %v560, 1
        %v562 = vadd.f32 %v560, %v561
        %s563 = vtos %v562
        %v564 = vstv %s563
        %v565 = vadd.f32 %v553, %v564
        %v566 = vrcp.pop 24.0
        %v567 = vmul.f32 24.0, %v566
        %v568 = vsub.f32 1.0, %v567
        %v569 = vmul.f32 %v566, %v568
        %v570 = vadd.f32 %v566, %v569
        %vm571 = vweird.f32 %v566
        %v572 = vsel %vm571, %v566, %v570
        %v573 = vmul.f32 %v565, %v572
        %v574 = vsub.f32 %v484, %v573
        %v575 = vmul.f32 %v574, %v574
        %v576 = vsel %vm415, %v575, 0.0
        %577 = vadd.xlane.f32.xlu0 %v576
        %v578 = vpop.xlane.xlu0 %577
        %v579 = vrot.slane %v578, 4
        %v580 = vadd.f32 %v578, %v579
        %v581 = vrot.slane %v580, 2
        %v582 = vadd.f32 %v580, %v581
        %v583 = vrot.slane %v582, 1
        %v584 = vadd.f32 %v582, %v583
        %s585 = vtos %v584
        %v586 = vstv %s585
        %v587 = vsub.f32 %v541, %v573
        %v588 = vmul.f32 %v587, %v587
        %v589 = vsel %vm412, %v588, 0.0
        %590 = vadd.xlane.f32.xlu0 %v589
        %v591 = vpop.xlane.xlu0 %590
        %v592 = vrot.slane %v591, 4
        %v593 = vadd.f32 %v591, %v592
        %v594 = vrot.slane %v593, 2
        %v595 = vadd.f32 %v593, %v594
        %v596 = vrot.slane %v595, 1
        %v597 = vadd.f32 %v595, %v596
        %s598 = vtos %v597
        %v599 = vstv %s598
        %v600 = vadd.f32 %v586, %v599
        %v601 = vmul.f32 %v600, %v572
        %v602 = vadd.f32 %v601, 1e-05
        %v603 = vrsqrt.pop %v602
        %v604 = vmul.f32 %v603, %v602
        %v605 = vmul.f32 %v604, %v603
        %v606 = vmul.f32 0.5, %v605
        %v607 = vsub.f32 1.5, %v606
        %v608 = vmul.f32 %v603, %v607
        %vm609 = vweird.f32 %v602
        %vm610 = vweird.f32 %v603
        %vm611 = vmor %vm609, %vm610
        %v612 = vsel %vm611, %v603, %v608
        %v613 = vmul.f32 %v574, %v612
        %v614 = vmul.f32 %v587, %v612
        %vm615 = vcmp.gt.f32.partialorder %v613, 0.0
        %v616 = vmul.f32 %v613, 0.1
        %v617 = vsel %vm615, %v613, %v616
        %vm618 = vcmp.gt.f32.partialorder %v614, 0.0
        %v619 = vmul.f32 %v614, 0.1
        %v620 = vsel %vm618, %v614, %v619
        %622 = vrot.lane.b32.xlu0 %v617, 1
        %v623 = vpop.permute.xlu0 %622
        %v625 = vsel %vm412, 0.0, %v623
        %vm626 = vcmask 23552
        %v627 = vsel %vm626, %v625, 0.0
        %v628 = vsel %vm626, %v414, 0.0
        %630 = vrot.lane.b32.xlu0 %v620, 1
        %v631 = vpop.permute.xlu0 %630
        %v633 = vsel %vm412, 0.0, %v631
        %v634 = vsel %vm415, %v633, 0.0
        %v635 = vld [vmem:[#allocation8] sm:$0xff]
        %v638 = vrot.slane %v627, 7
        %v639 = vrot.slane %v628, 7
        %v640 = vsel %vm422, %v638, %v639
        %641 = vrot.lane.b32.xlu0 %v638, 1
        %v642 = vpop.permute.xlu0 %641
        %643 = vrot.lane.b32.xlu0 %v640, 1
        %v644 = vpop.permute.xlu0 %643
        %v647 = vrot.slane %v627, 6
        %v648 = vrot.slane %v628, 6
        %v649 = vsel %vm460, %v647, %v648
        %650 = vrot.lane.b32.xlu0 %v647, 2
        %v651 = vpop.permute.xlu0 %650
        %652 = vrot.lane.b32.xlu0 %v649, 2
        %v653 = vpop.permute.xlu0 %652
        %v657 = vrot.slane %v634, 5
        %v658 = vrot.slane %v417, 5
        %v659 = vsel %vm517, %v657, %v658
        %660 = vrot.lane.b32.xlu0 %v657, 1
        %v661 = vpop.permute.xlu0 %660
        %662 = vrot.lane.b32.xlu0 %v659, 1
        %v663 = vpop.permute.xlu0 %662
        %vm666 = vcmask 1043456
        %v667 = vrot.slane %v634, 4
        %v668 = vrot.slane %v417, 4
        %v669 = vsel %vm666, %v667, %v668
        %670 = vrot.lane.b32.xlu0 %v667, 2
        %v671 = vpop.permute.xlu0 %670
        %672 = vrot.lane.b32.xlu0 %v669, 2
        %v673 = vpop.permute.xlu0 %672
        %v675 = vsel %vm422, %v628, %v642
        %v676 = vsel %vm460, %v644, %v651
        %v677 = vsel %vm517, %v653, %v661
        %v678 = vsel %vm666, %v663, %v671
        %v679 = vld [vmem:[#allocation5] sm:$0xff]
        %681 = vset.pattern.permute.xlu0 0
        %682 = vperm.xlu0 %681, %v635
        %v683 = vpop.permute.xlu0 %682
        %689 = vrot.lane.b32.xlu0 %v627, 126
        %v690 = vpop.permute.xlu0 %689
        %691 = vrot.lane.b32.xlu0 %v675, 126
        %v692 = vpop.permute.xlu0 %691
        %693 = vrot.lane.b32.xlu0 %v676, 126
        %v694 = vpop.permute.xlu0 %693
        %695 = vrot.lane.b32.xlu0 %v677, 126
        %v696 = vpop.permute.xlu0 %695
        %697 = vrot.lane.b32.xlu0 %v678, 126
        %v698 = vpop.permute.xlu0 %697
        %699 = vrot.lane.b32.xlu0 %v673, 126
        %v700 = vpop.permute.xlu0 %699
        %vm706 = vcmask 367616
        %v708 = vsel %vm706, %v679, 0
        %vm710 = vcmask 1044480
        %v711 = vsel %vm710, %v700, 0
        %713 = vmatpush.msra.mxu0 0.0
        %714 = vmatpush.msra.mxu0 0.0
        %715 = vmatpush.msra.mxu0 0.0
        %716 = vmatpush.msra.mxu0 0.0
        %717 = vmatpush.msra.mxu0 0.0
        %718 = vmatpush.msra.mxu0 0.0
        %719 = vmatpush.msra.mxu0 0.0
        %720 = vmatpush.msra.mxu0 0.0
        %721 = vmatpush.msra.mxu0 0.0
        %722 = vmatpush.msra.mxu0 0.0
        %723 = vmatpush.msra.mxu0 %v711
        %724 = vmatpush.msra.mxu0 %v698
        %725 = vmatpush.msra.mxu0 %v696
        %726 = vmatpush.msra.mxu0 %v694
        %727 = vmatpush.msra.mxu0 %v692
        %728 = vmatpush.msra.mxu0 %v690
        %729 = vmatmul.f32.gmra.mxu0 %v708
        %v730 = vpop.f32.mrf.mxu0
        %v731 = vadd.f32 %v683, %v730
        %732 = vdwg.mxu0
        %v733 = vrot.slane %v634, 6
        %v734 = vsel %vm460, %v733, %v488
        %v737 = vsel %vm460, %v644, %v733
        %v738 = vsel %vm517, %v734, %v661
        %v739 = vld [vmem:[#allocation7] sm:$0xff]
        %742 = vrot.lane.b32.xlu0 %v737, 126
        %v743 = vpop.permute.xlu0 %742
        %744 = vrot.lane.b32.xlu0 %v738, 126
        %v745 = vpop.permute.xlu0 %744
        %v749 = vsel %vm706, %v739, 0
        %751 = vmatpush.msra.mxu0 0.0
        %752 = vmatpush.msra.mxu0 0.0
        %753 = vmatpush.msra.mxu0 0.0
        %754 = vmatpush.msra.mxu0 0.0
        %755 = vmatpush.msra.mxu0 0.0
        %756 = vmatpush.msra.mxu0 0.0
        %757 = vmatpush.msra.mxu0 0.0
        %758 = vmatpush.msra.mxu0 0.0
        %759 = vmatpush.msra.mxu0 0.0
        %760 = vmatpush.msra.mxu0 0.0
        %761 = vmatpush.msra.mxu0 %v711
        %762 = vmatpush.msra.mxu0 %v698
        %763 = vmatpush.msra.mxu0 %v745
        %764 = vmatpush.msra.mxu0 %v743
        %765 = vmatpush.msra.mxu0 %v692
        %766 = vmatpush.msra.mxu0 %v690
        %767 = vmatmul.f32.gmra.mxu0 %v749
        %v768 = vpop.f32.mrf.mxu0
        %v769 = vadd.f32 %v635, %v768
        %770 = vdwg.mxu0
        %v771 = vsel %vm415, %v731, 0.0
        %772 = vadd.xlane.f32.xlu0 %v771
        %v773 = vpop.xlane.xlu0 %772
        %v774 = vrot.slane %v773, 4
        %v775 = vadd.f32 %v773, %v774
        %v776 = vrot.slane %v775, 2
        %v777 = vadd.f32 %v775, %v776
        %v778 = vrot.slane %v777, 1
        %v779 = vadd.f32 %v777, %v778
        %s780 = vtos %v779
        %v781 = vstv %s780
        %v782 = vsel %vm412, %v769, 0.0
        %783 = vadd.xlane.f32.xlu0 %v782
        %v784 = vpop.xlane.xlu0 %783
        %v785 = vrot.slane %v784, 4
        %v786 = vadd.f32 %v784, %v785
        %v787 = vrot.slane %v786, 2
        %v788 = vadd.f32 %v786, %v787
        %v789 = vrot.slane %v788, 1
        %v790 = vadd.f32 %v788, %v789
        %s791 = vtos %v790
        %v792 = vstv %s791
        %v793 = vadd.f32 %v781, %v792
        %v794 = vmul.f32 %v793, %v572
        %v795 = vsub.f32 %v731, %v794
        %v796 = vmul.f32 %v795, %v795
        %v797 = vsel %vm415, %v796, 0.0
        %798 = vadd.xlane.f32.xlu0 %v797
        %v799 = vpop.xlane.xlu0 %798
        %v800 = vrot.slane %v799, 4
        %v801 = vadd.f32 %v799, %v800
        %v802 = vrot.slane %v801, 2
        %v803 = vadd.f32 %v801, %v802
        %v804 = vrot.slane %v803, 1
        %v805 = vadd.f32 %v803, %v804
        %s806 = vtos %v805
        %v807 = vstv %s806
        %v808 = vsub.f32 %v769, %v794
        %v809 = vmul.f32 %v808, %v808
        %v810 = vsel %vm412, %v809, 0.0
        %811 = vadd.xlane.f32.xlu0 %v810
        %v812 = vpop.xlane.xlu0 %811
        %v813 = vrot.slane %v812, 4
        %v814 = vadd.f32 %v812, %v813
        %v815 = vrot.slane %v814, 2
        %v816 = vadd.f32 %v814, %v815
        %v817 = vrot.slane %v816, 1
        %v818 = vadd.f32 %v816, %v817
        %s819 = vtos %v818
        %v820 = vstv %s819
        %v821 = vadd.f32 %v807, %v820
        %v822 = vmul.f32 %v821, %v572
        %v823 = vadd.f32 %v822, 1e-05
        %v824 = vrsqrt.pop %v823
        %v825 = vmul.f32 %v824, %v823
        %v826 = vmul.f32 %v825, %v824
        %v827 = vmul.f32 0.5, %v826
        %v828 = vsub.f32 1.5, %v827
        %v829 = vmul.f32 %v824, %v828
        %vm830 = vweird.f32 %v823
        %vm831 = vweird.f32 %v824
        %vm832 = vmor %vm830, %vm831
        %v833 = vsel %vm832, %v824, %v829
        %v834 = vmul.f32 %v795, %v833
        %v835 = vmul.f32 %v808, %v833
        %vm836 = vcmp.gt.f32.partialorder %v834, 0.0
        %v837 = vmul.f32 %v834, 0.1
        %v838 = vsel %vm836, %v834, %v837
        %vm839 = vcmp.gt.f32.partialorder %v835, 0.0
        %v840 = vmul.f32 %v835, 0.1
        %v841 = vsel %vm839, %v835, %v840
        %v842 = vadd.f32 %v481, %v838
        %843 = vst.msk [vmem:[%s396] sm:$0xff] %vm415, %v842
        %v844 = vadd.f32 %v538, %v841
        %845 = vst.msk [vmem:[%s400] sm:$0xff] %vm412, %v844
        %p846 = scmp.lt.s32.totalorder %s25, 2
        %s847 = scalar_select %p846, %s25, 2
        %s848 = smul.addr %s847, 8
        %s849 = scalar_lea.vmem %s8, %s848
        %p850 = scmp.lt.s32.totalorder %s25, 2
        %s851 = scalar_select %p850, %s25, 2
        %s852 = smul.addr %s851, 8
        %s853 = scalar_lea.vmem %s9, %s852
        // Predicated region
        $region69: #{step.2} parent=51 // pred_check
          %p854 = pneg %p216
        $region70: #{step.2} parent=51 // pred_check_branch
          %856 = sbr.rel (%p854) target = $region72
        $region71: #{step.2} parent=51 // pred_region
          _
        $region72: #{step.2} parent=51 // pred_fallthru
          _
        // Predicated region
        $region73: #{step.2} parent=51 // pred_check
          %p857 = pneg %p242
        $region74: #{step.2} parent=51 // pred_check_branch
          %859 = sbr.rel (%p857) target = $region76
        $region75: #{step.2} parent=51 // pred_region
          _
        $region76: #{step.2} parent=51 // pred_fallthru
          _
      $region52: #{step.2} parent=5 // pred_fallthru
        _
      %p860 = scmp.le.s32.totalorder 2, %s20
      // Predicated region
      $region77: #{step.2} parent=5 // pred_check
        %p861 = pneg %p860
      $region78: #{step.2} parent=5 // pred_check_branch
        %863 = sbr.rel (%p861) target = $region80
      $region79: #{step.2} parent=5 // pred_region
        %s864 = ssub.s32 %s20, 2
        // Predicated region
        $region81: #{step.2} parent=79 // pred_check
          %p865 = pneg %p222
        $region82: #{step.2} parent=79 // pred_check_branch
          %867 = sbr.rel (%p865) target = $region84
        $region83: #{step.2} parent=79 // pred_region
          %p868 = scmp.lt.s32.totalorder %s26, 2
          %s869 = scalar_select %p868, %s26, 2
          %s870 = smul.addr %s869, 8
          %s871 = scalar_lea.vmem %s8, %s870
        $region84: #{step.2} parent=79 // pred_fallthru
          _
        // Predicated region
        $region85: #{step.2} parent=79 // pred_check
          %p872 = pneg %p248
        $region86: #{step.2} parent=79 // pred_check_branch
          %874 = sbr.rel (%p872) target = $region88
        $region87: #{step.2} parent=79 // pred_region
          %p875 = scmp.lt.s32.totalorder %s26, 2
          %s876 = scalar_select %p875, %s26, 2
          %s877 = smul.addr %s876, 8
          %s878 = scalar_lea.vmem %s9, %s877
        $region88: #{step.2} parent=79 // pred_fallthru
          _
      $region80: #{step.2} parent=5 // pred_fallthru
        _
    $region6: #{step.2} parent=1 // loop_footer
      %s24 = sadd.s32 1, %s20
    $region7: #{step.2} parent=1 // loop_footer_branch
      %19 = sbr.rel target = $region3
    $region8: #{step.2} parent=1 // loop_exit
      _
    %879 = vsyncpa [#allocation4], 1
    %s880 = scalar_lea.sflag [#allocation4], 1
    %881 = vsyncpa %s880, 1
    %882 = vsyncpa [#allocation6], 1
    %883 = vsyncpa [#allocation9], 1

// kernel: step.3
$region0: #{step.3}
  #allocation0 [shape = 'u32[]', space=smem, size = 0x4, offset = 0x4, fixed_abs, tag = 'smem constant byte address 0x4 - core index']
  #allocation1 [shape = 'u32[72,128]{1,0:T(1,128)}', space=vmem, size = 0x9000, scoped, tag = 'internal scratch']
  #allocation2 [shape = 'f32[1]{0:T(128)S(6)}', space=smem, size = 0x200, scoped, tag = 'scoped memory for step.3']
  %s0 = inlined_call_operand.<no memory space> [shape: f32[1], index: 0, kind: input, shape index: {}]
  %s1 = inlined_call_operand.vmem [shape: f32[3,8,3], index: 1, kind: input, shape index: {}]
  %s2 = inlined_call_operand.vmem [shape: f32[16,45], index: 2, kind: input, shape index: {}]
  %s3 = inlined_call_operand.vmem [shape: f32[16,1], index: 3, kind: input, shape index: {}]
  %s4 = inlined_call_operand.vmem [shape: f32[8,45], index: 4, kind: input, shape index: {}]
  %s5 = inlined_call_operand.vmem [shape: f32[8,1], index: 5, kind: input, shape index: {}]
  %s6 = inlined_call_operand.vmem [shape: f32[3,8,5], index: 6, kind: output, shape index: {}]
  %s7 = sld [smem:[#allocation0]]
  $region57: #{step.3} parent=0
    _
  %s9 = ssub.s32 1, %s7
  %s10 = scalar_select 0, %s9, %s7
  %11 = sst [smem:[#allocation2]] %s0
  loop: start=0, step=1, limit=5
  $region2: #{step.3} parent=0 // loop_pre_header
    _
  $region3: #{step.3} parent=0 // loop_header
    %s13 = sphi 0, %s17
    %p14 = scmp.ge.s32.totalorder %s13, 5
    %s21 = sphi 0, %s21
    %s23 = sphi 0, %s21
    %s24 = sphi 0, %s23
    %s38 = sphi 0, %s24
    %s44 = sphi 0, %s46
    %s47 = sphi 0, %s44
    %s48 = sphi 0, %s47
    %s64 = sphi 0, %s48
    %s68 = sphi 0, %s68
    %s70 = sphi 0, %s68
    %s71 = sphi 0, %s70
    %s85 = sphi 0, %s71
    %s89 = sphi 0, %s89
    %s91 = sphi 0, %s89
    %s92 = sphi 0, %s91
    %s106 = sphi 0, %s92
    %s110 = sphi 0, %s110
    %s112 = sphi 0, %s110
    %s113 = sphi 0, %s112
    %s127 = sphi 0, %s113
    %s131 = sphi 0, %s131
    %s133 = sphi 0, %s131
    %s134 = sphi 0, %s133
    %s148 = sphi 0, %s134
    %s154 = sphi 0, %s156
    %s157 = sphi 0, %s154
    %s158 = sphi 0, %s157
    %s174 = sphi 0, %s158
  $region4: #{step.3} parent=0 // loop_header_branch
    %16 = sbr.rel (%p14) target = $region8
  $region5: #{step.3} parent=0 // loop_body
    %s18 = ssub.s32 %s13, 1
    %s19 = ssub.s32 %s13, 2
    %s20 = sadd.s32 %s13, 1
    %s22 = sadd.s32 %s21, 1
    %p25 = scmp.eq.s32.totalorder %s13, 2
    %p26 = scmp.ne.s32.totalorder %s21, %s23
    %p27 = scmp.eq.s32.totalorder %s13, 0
    %p28 = por %p26, %p27
    %p29 = scmp.ne.s32.totalorder %s21, %s23
    %p30 = scmp.eq.s32.totalorder %s18, 2
    %p31 = por %p29, %p30
    %p32 = scmp.ne.s32.totalorder %s23, %s24
    %p33 = scmp.eq.s32.totalorder %s18, 0
    %p34 = por %p32, %p33
    %p35 = scmp.ne.s32.totalorder %s23, %s24
    %p36 = scmp.eq.s32.totalorder %s19, 2
    %p37 = por %p35, %p36
    %p39 = scmp.ne.s32.totalorder %s24, %s38
    %p40 = scmp.eq.s32.totalorder %s19, 0
    %p41 = por %p39, %p40
    %s42 = ssub.s32 %s13, %s20
    %p43 = scmp.eq.s32.totalorder %s42, 0
    %s45 = sadd.s32 %s44, 1
    %s46 = scalar_select %p43, %s44, %s45
    %p49 = pneg %p43
    %p50 = scmp.eq.s32.totalorder %s13, 2
    %p51 = por %p49, %p50
    %p52 = scmp.ne.s32.totalorder %s44, %s47
    %p53 = scmp.eq.s32.totalorder %s13, 0
    %p54 = por %p52, %p53
    %p55 = scmp.ne.s32.totalorder %s44, %s47
    %p56 = scmp.eq.s32.totalorder %s18, 2
    %p57 = por %p55, %p56
    %p58 = scmp.ne.s32.totalorder %s47, %s48
    %p59 = scmp.eq.s32.totalorder %s18, 0
    %p60 = por %p58, %p59
    %p61 = scmp.ne.s32.totalorder %s47, %s48
    %p62 = scmp.eq.s32.totalorder %s19, 2
    %p63 = por %p61, %p62
    %p65 = scmp.ne.s32.totalorder %s48, %s64
    %p66 = scmp.eq.s32.totalorder %s19, 0
    %p67 = por %p65, %p66
    %s69 = sadd.s32 %s68, 1
    %p72 = scmp.eq.s32.totalorder %s13, 2
    %p73 = scmp.ne.s32.totalorder %s68, %s70
    %p74 = scmp.eq.s32.totalorder %s13, 0
    %p75 = por %p73, %p74
    %p76 = scmp.ne.s32.totalorder %s68, %s70
    %p77 = scmp.eq.s32.totalorder %s18, 2
    %p78 = por %p76, %p77
    %p79 = scmp.ne.s32.totalorder %s70, %s71
    %p80 = scmp.eq.s32.totalorder %s18, 0
    %p81 = por %p79, %p80
    %p82 = scmp.ne.s32.totalorder %s70, %s71
    %p83 = scmp.eq.s32.totalorder %s19, 2
    %p84 = por %p82, %p83
    %p86 = scmp.ne.s32.totalorder %s71, %s85
    %p87 = scmp.eq.s32.totalorder %s19, 0
    %p88 = por %p86, %p87
    %s90 = sadd.s32 %s89, 1
    %p93 = scmp.eq.s32.totalorder %s13, 2
    %p94 = scmp.ne.s32.totalorder %s89, %s91
    %p95 = scmp.eq.s32.totalorder %s13, 0
    %p96 = por %p94, %p95
    %p97 = scmp.ne.s32.totalorder %s89, %s91
    %p98 = scmp.eq.s32.totalorder %s18, 2
    %p99 = por %p97, %p98
    %p100 = scmp.ne.s32.totalorder %s91, %s92
    %p101 = scmp.eq.s32.totalorder %s18, 0
    %p102 = por %p100, %p101
    %p103 = scmp.ne.s32.totalorder %s91, %s92
    %p104 = scmp.eq.s32.totalorder %s19, 2
    %p105 = por %p103, %p104
    %p107 = scmp.ne.s32.totalorder %s92, %s106
    %p108 = scmp.eq.s32.totalorder %s19, 0
    %p109 = por %p107, %p108
    %s111 = sadd.s32 %s110, 1
    %p114 = scmp.eq.s32.totalorder %s13, 2
    %p115 = scmp.ne.s32.totalorder %s110, %s112
    %p116 = scmp.eq.s32.totalorder %s13, 0
    %p117 = por %p115, %p116
    %p118 = scmp.ne.s32.totalorder %s110, %s112
    %p119 = scmp.eq.s32.totalorder %s18, 2
    %p120 = por %p118, %p119
    %p121 = scmp.ne.s32.totalorder %s112, %s113
    %p122 = scmp.eq.s32.totalorder %s18, 0
    %p123 = por %p121, %p122
    %p124 = scmp.ne.s32.totalorder %s112, %s113
    %p125 = scmp.eq.s32.totalorder %s19, 2
    %p126 = por %p124, %p125
    %p128 = scmp.ne.s32.totalorder %s113, %s127
    %p129 = scmp.eq.s32.totalorder %s19, 0
    %p130 = por %p128, %p129
    %s132 = sadd.s32 %s131, 1
    %p135 = scmp.eq.s32.totalorder %s13, 2
    %p136 = scmp.ne.s32.totalorder %s131, %s133
    %p137 = scmp.eq.s32.totalorder %s13, 0
    %p138 = por %p136, %p137
    %p139 = scmp.ne.s32.totalorder %s131, %s133
    %p140 = scmp.eq.s32.totalorder %s18, 2
    %p141 = por %p139, %p140
    %p142 = scmp.ne.s32.totalorder %s133, %s134
    %p143 = scmp.eq.s32.totalorder %s18, 0
    %p144 = por %p142, %p143
    %p145 = scmp.ne.s32.totalorder %s133, %s134
    %p146 = scmp.eq.s32.totalorder %s19, 2
    %p147 = por %p145, %p146
    %p149 = scmp.ne.s32.totalorder %s134, %s148
    %p150 = scmp.eq.s32.totalorder %s19, 0
    %p151 = por %p149, %p150
    %s152 = ssub.s32 %s13, %s20
    %p153 = scmp.eq.s32.totalorder %s152, 0
    %s155 = sadd.s32 %s154, 1
    %s156 = scalar_select %p153, %s154, %s155
    %p159 = pneg %p153
    %p160 = scmp.eq.s32.totalorder %s13, 2
    %p161 = por %p159, %p160
    %p162 = scmp.ne.s32.totalorder %s154, %s157
    %p163 = scmp.eq.s32.totalorder %s13, 0
    %p164 = por %p162, %p163
    %p165 = scmp.ne.s32.totalorder %s154, %s157
    %p166 = scmp.eq.s32.totalorder %s18, 2
    %p167 = por %p165, %p166
    %p168 = scmp.ne.s32.totalorder %s157, %s158
    %p169 = scmp.eq.s32.totalorder %s18, 0
    %p170 = por %p168, %p169
    %p171 = scmp.ne.s32.totalorder %s157, %s158
    %p172 = scmp.eq.s32.totalorder %s19, 2
    %p173 = por %p171, %p172
    %p175 = scmp.ne.s32.totalorder %s158, %s174
    %p176 = scmp.eq.s32.totalorder %s19, 0
    %p177 = por %p175, %p176
    %p178 = scmp.le.s32.totalorder 1, %s13
    %p179 = scmp.lt.s32.totalorder %s13, 4
    %p180 = pnand %p178, %p179
    %p181 = pneg %p180
    // Predicated region
    $region9: #{step.3} parent=5 // pred_check
      _
    $region10: #{step.3} parent=5 // pred_check_branch
      %183 = sbr.rel (%p180) target = $region12
    $region11: #{step.3} parent=5 // pred_region
      %s184 = ssub.s32 %s13, 1
      // Predicated region
      $region13: #{step.3} parent=11 // pred_check
        %p185 = pneg %p34
      $region14: #{step.3} parent=11 // pred_check_branch
        %187 = sbr.rel (%p185) target = $region16
      $region15: #{step.3} parent=11 // pred_region
        _
      $region16: #{step.3} parent=11 // pred_fallthru
        _
      // Predicated region
      $region17: #{step.3} parent=11 // pred_check
        %p188 = pneg %p81
      $region18: #{step.3} parent=11 // pred_check_branch
        %190 = sbr.rel (%p188) target = $region20
      $region19: #{step.3} parent=11 // pred_region
        _
      $region20: #{step.3} parent=11 // pred_fallthru
        _
      // Predicated region
      $region21: #{step.3} parent=11 // pred_check
        %p191 = pneg %p102
      $region22: #{step.3} parent=11 // pred_check_branch
        %193 = sbr.rel (%p191) target = $region24
      $region23: #{step.3} parent=11 // pred_region
        _
      $region24: #{step.3} parent=11 // pred_fallthru
        _
      // Predicated region
      $region25: #{step.3} parent=11 // pred_check
        %p194 = pneg %p123
      $region26: #{step.3} parent=11 // pred_check_branch
        %196 = sbr.rel (%p194) target = $region28
      $region27: #{step.3} parent=11 // pred_region
        _
      $region28: #{step.3} parent=11 // pred_fallthru
        _
      // Predicated region
      $region29: #{step.3} parent=11 // pred_check
        %p197 = pneg %p144
      $region30: #{step.3} parent=11 // pred_check_branch
        %199 = sbr.rel (%p197) target = $region32
      $region31: #{step.3} parent=11 // pred_region
        _
      $region32: #{step.3} parent=11 // pred_fallthru
        _
    $region12: #{step.3} parent=5 // pred_fallthru
      _
    %p200 = scmp.lt.s32.totalorder %s13, 3
    // Predicated region
    $region33: #{step.3} parent=5 // pred_check
      %p201 = pneg %p200
    $region34: #{step.3} parent=5 // pred_check_branch
      %203 = sbr.rel (%p201) target = $region36
    $region35: #{step.3} parent=5 // pred_region
      // Predicated region
      $region37: #{step.3} parent=35 // pred_check
        %p204 = pneg %p54
      $region38: #{step.3} parent=35 // pred_check_branch
        %206 = sbr.rel (%p204) target = $region40
      $region39: #{step.3} parent=35 // pred_region
        %p207 = scmp.lt.s32.totalorder %s13, 2
        %s208 = scalar_select %p207, %s13, 2
        %s209 = smul.addr %s208, 8
        %s210 = scalar_lea.vmem %s1, %s209
      $region40: #{step.3} parent=35 // pred_fallthru
        _
    $region36: #{step.3} parent=5 // pred_fallthru
      _
    %p211 = scmp.le.s32.totalorder 1, %s13
    %p212 = scmp.lt.s32.totalorder %s13, 4
    %p213 = pnand %p211, %p212
    %p214 = pneg %p213
    // Predicated region
    $region41: #{step.3} parent=5 // pred_check
      _
    $region42: #{step.3} parent=5 // pred_check_branch
      %216 = sbr.rel (%p213) target = $region44
    $region43: #{step.3} parent=5 // pred_region
      %s217 = ssub.s32 %s13, 1
      %p218 = pneg %p34
      %p219 = pneg %p31
      %p220 = scmp.lt.s32.totalorder %s18, 2
      %s221 = scalar_select %p220, %s18, 2
      %s222 = smul.addr %s221, 8
      %s223 = scalar_lea.vmem %s1, %s222
      %p224 = pneg %p60
      %p225 = pneg %p57
      %p226 = pneg %p81
      %p227 = pneg %p78
      %p228 = pneg %p102
      %p229 = pneg %p99
      %p230 = pneg %p123
      %p231 = pneg %p120
      %p232 = pneg %p144
      %p233 = pneg %p141
      %p234 = pneg %p170
      %p235 = pneg %p167
      %p236 = scmp.lt.s32.totalorder %s18, 2
      %s237 = scalar_select %p236, %s18, 2
      %s238 = smul.addr %s237, 8
      %s239 = scalar_lea.vmem %s6, %s238
      %p240 = scmp.lt.s32.totalorder %s18, 2
      %s241 = scalar_select %p240, %s18, 2
      %s242 = smul.addr %s241, 8
      %s243 = scalar_lea.vmem %s1, %s242
      %p244 = scmp.lt.s32.totalorder %s18, 2
      %s245 = scalar_select %p244, %s18, 2
      %s246 = smul.addr %s245, 8
      %s247 = scalar_lea.vmem %s6, %s246
      %s248 = sld [smem:[#allocation2]]
      %v249 = vld [vmem:[%s243] sm:$0xff]
      %v250 = vstv %s248
      %253 = vrot.lane.b32.xlu0 %v249, 3
      %v254 = vpop.permute.xlu0 %253
      %255 = vrot.lane.b32.xlu0 %v250, 3
      %v256 = vpop.permute.xlu0 %255
      %vm259 = vcmask 23552
      %v260 = vsel %vm259, 0.0, %v254
      %v261 = vsel %vm259, 0.0, %v256
      %vm262 = vcmask 48128
      %v263 = vsel %vm262, %v260, 0.0
      %v264 = vsel %vm262, %v261, 0.0
      %v265 = vld [vmem:[%s3] sm:$0xff]
      %v266 = vld [vmem:[%s3 + $0x8] sm:$0xff]
      %vm269 = vcmask 1040384
      %v270 = vrot.slane %v263, 7
      %v271 = vrot.slane %v264, 7
      %v272 = vsel %vm269, %v270, %v271
      %273 = vrot.lane.b32.xlu0 %v270, 1
      %v274 = vpop.permute.xlu0 %273
      %275 = vrot.lane.b32.xlu0 %v272, 1
      %v276 = vpop.permute.xlu0 %275
      %vm279 = vcmask 1041408
      %v280 = vrot.slane %v263, 6
      %v281 = vrot.slane %v264, 6
      %v282 = vsel %vm279, %v280, %v281
      %283 = vrot.lane.b32.xlu0 %v280, 2
      %v284 = vpop.permute.xlu0 %283
      %285 = vrot.lane.b32.xlu0 %v282, 2
      %v286 = vpop.permute.xlu0 %285
      %vm289 = vcmask 1042432
      %v290 = vrot.slane %v263, 5
      %v291 = vrot.slane %v264, 5
      %v292 = vsel %vm289, %v290, %v291
      %293 = vrot.lane.b32.xlu0 %v290, 3
      %v294 = vpop.permute.xlu0 %293
      %295 = vrot.lane.b32.xlu0 %v292, 3
      %v296 = vpop.permute.xlu0 %295
      %vm299 = vcmask 1043456
      %v300 = vrot.slane %v263, 4
      %v301 = vrot.slane %v264, 4
      %v302 = vsel %vm299, %v300, %v301
      %303 = vrot.lane.b32.xlu0 %v300, 4
      %v304 = vpop.permute.xlu0 %303
      %305 = vrot.lane.b32.xlu0 %v302, 4
      %v306 = vpop.permute.xlu0 %305
      %v308 = vsel %vm269, %v264, %v274
      %v309 = vsel %vm279, %v276, %v284
      %v310 = vsel %vm289, %v286, %v294
      %v311 = vsel %vm299, %v296, %v304
      %v312 = vld [vmem:[%s2] sm:$0xff]
      %v313 = vld [vmem:[%s2 + $0x8] sm:$0xff]
      %315 = vset.pattern.permute.xlu0 0
      %316 = vperm.xlu0 %315, %v265
      %v317 = vpop.permute.xlu0 %316
      %320 = vset.pattern.permute.xlu0 0
      %321 = vperm.xlu0 %320, %v266
      %v322 = vpop.permute.xlu0 %321
      %328 = vrot.lane.b32.xlu0 %v263, 124
      %v329 = vpop.permute.xlu0 %328
      %330 = vrot.lane.b32.xlu0 %v308, 124
      %v331 = vpop.permute.xlu0 %330
      %332 = vrot.lane.b32.xlu0 %v309, 124
      %v333 = vpop.permute.xlu0 %332
      %334 = vrot.lane.b32.xlu0 %v310, 124
      %v335 = vpop.permute.xlu0 %334
      %336 = vrot.lane.b32.xlu0 %v311, 124
      %v337 = vpop.permute.xlu0 %336
      %338 = vrot.lane.b32.xlu0 %v306, 124
      %v339 = vpop.permute.xlu0 %338
      %vm345 = vcmask 367616
      %v347 = vsel %vm345, %v312, 0
      %v350 = vsel %vm345, %v313, 0
      %vm352 = vcmask 1044480
      %v353 = vsel %vm352, %v339, 0
      %355 = vmatpush.msra.mxu0 0.0
      %356 = vmatpush.msra.mxu0 0.0
      %357 = vmatpush.msra.mxu0 0.0
      %358 = vmatpush.msra.mxu0 0.0
      %359 = vmatpush.msra.mxu0 0.0
      %360 = vmatpush.msra.mxu0 0.0
      %361 = vmatpush.msra.mxu0 0.0
      %362 = vmatpush.msra.mxu0 0.0
      %363 = vmatpush.msra.mxu0 0.0
      %364 = vmatpush.msra.mxu0 0.0
      %365 = vmatpush.msra.mxu0 %v353
      %366 = vmatpush.msra.mxu0 %v337
      %367 = vmatpush.msra.mxu0 %v335
      %368 = vmatpush.msra.mxu0 %v333
      %369 = vmatpush.msra.mxu0 %v331
      %370 = vmatpush.msra.mxu0 %v329
      %371 = vmatmul.f32.gmra.mxu0 %v347
      %v372 = vpop.f32.mrf.mxu0
      %v373 = vadd.f32 %v317, %v372
      %374 = vmatmul.f32.gmra.mxu0 %v350
      %v375 = vpop.f32.mrf.mxu0
      %v376 = vadd.f32 %v322, %v375
      %377 = vdwg.mxu0
      %vm378 = vcmask 39936
      %v379 = vsel %vm378, %v376, 0.0
      %380 = vadd.xlane.f32.xlu0 %v379
      %v381 = vpop.xlane.xlu0 %380
      %v382 = vrot.slane %v381, 4
      %v383 = vadd.f32 %v381, %v382
      %v384 = vrot.slane %v383, 2
      %v385 = vadd.f32 %v383, %v384
      %v386 = vrot.slane %v385, 1
      %v387 = vadd.f32 %v385, %v386
      %s388 = vtos %v387
      %v389 = vstv %s388
      %v390 = vrcp.pop 40.0
      %v391 = vmul.f32 40.0, %v390
      %v392 = vsub.f32 1.0, %v391
      %v393 = vmul.f32 %v390, %v392
      %v394 = vadd.f32 %v390, %v393
      %vm395 = vweird.f32 %v390
      %v396 = vsel %vm395, %v390, %v394
      %v397 = vmul.f32 %v389, %v396
      %v398 = vsub.f32 %v376, %v397
      %v399 = vmul.f32 %v398, %v398
      %v400 = vsel %vm378, %v399, 0.0
      %401 = vadd.xlane.f32.xlu0 %v400
      %v402 = vpop.xlane.xlu0 %401
      %v403 = vrot.slane %v402, 4
      %v404 = vadd.f32 %v402, %v403
      %v405 = vrot.slane %v404, 2
      %v406 = vadd.f32 %v404, %v405
      %v407 = vrot.slane %v406, 1
      %v408 = vadd.f32 %v406, %v407
      %s409 = vtos %v408
      %v410 = vstv %s409
      %v411 = vmul.f32 %v410, %v396
      %v412 = vadd.f32 %v411, 1e-05
      %v413 = vrsqrt.pop %v412
      %v414 = vmul.f32 %v413, %v412
      %v415 = vmul.f32 %v414, %v413
      %v416 = vmul.f32 0.5, %v415
      %v417 = vsub.f32 1.5, %v416
      %v418 = vmul.f32 %v413, %v417
      %vm419 = vweird.f32 %v412
      %vm420 = vweird.f32 %v413
      %vm421 = vmor %vm419, %vm420
      %v422 = vsel %vm421, %v413, %v418
      %v423 = vmul.f32 %v398, %v422
      %vm424 = vcmp.gt.f32.partialorder %v423, 0.0
      %v425 = vmul.f32 %v423, 0.1
      %v426 = vsel %vm424, %v423, %v425
      %428 = vrot.lane.b32.xlu0 %v426, 2
      %v429 = vpop.permute.xlu0 %428
      %430 = vrot.lane.b32.xlu0 %v250, 2
      %v431 = vpop.permute.xlu0 %430
      %vm434 = vcmask 15360
      %v435 = vsel %vm434, 0.0, %v429
      %v436 = vsel %vm434, 0.0, %v431
      %vm437 = vcmask 56320
      %v438 = vsel %vm437, %v435, 0.0
      %v439 = vsel %vm437, %v436, 0.0
      %v440 = vld [vmem:[%s5] sm:$0xff]
      %v443 = vrot.slane %v438, 7
      %v444 = vrot.slane %v439, 7
      %v445 = vsel %vm269, %v443, %v444
      %446 = vrot.lane.b32.xlu0 %v443, 1
      %v447 = vpop.permute.xlu0 %446
      %448 = vrot.lane.b32.xlu0 %v445, 1
      %v449 = vpop.permute.xlu0 %448
      %v452 = vrot.slane %v438, 6
      %v453 = vrot.slane %v439, 6
      %v454 = vsel %vm279, %v452, %v453
      %455 = vrot.lane.b32.xlu0 %v452, 2
      %v456 = vpop.permute.xlu0 %455
      %457 = vrot.lane.b32.xlu0 %v454, 2
      %v458 = vpop.permute.xlu0 %457
      %v461 = vrot.slane %v438, 5
      %v462 = vrot.slane %v439, 5
      %v463 = vsel %vm289, %v461, %v462
      %464 = vrot.lane.b32.xlu0 %v461, 3
      %v465 = vpop.permute.xlu0 %464
      %466 = vrot.lane.b32.xlu0 %v463, 3
      %v467 = vpop.permute.xlu0 %466
      %v470 = vrot.slane %v438, 4
      %v471 = vrot.slane %v439, 4
      %v472 = vsel %vm299, %v470, %v471
      %473 = vrot.lane.b32.xlu0 %v470, 4
      %v474 = vpop.permute.xlu0 %473
      %475 = vrot.lane.b32.xlu0 %v472, 4
      %v476 = vpop.permute.xlu0 %475
      %v478 = vsel %vm269, %v439, %v447
      %v479 = vsel %vm279, %v449, %v456
      %v480 = vsel %vm289, %v458, %v465
      %v481 = vsel %vm299, %v467, %v474
      %v482 = vld [vmem:[%s4] sm:$0xff]
      %484 = vset.pattern.permute.xlu0 0
      %485 = vperm.xlu0 %484, %v440
      %v486 = vpop.permute.xlu0 %485
      %492 = vrot.lane.b32.xlu0 %v438, 124
      %v493 = vpop.permute.xlu0 %492
      %494 = vrot.lane.b32.xlu0 %v478, 124
      %v495 = vpop.permute.xlu0 %494
      %496 = vrot.lane.b32.xlu0 %v479, 124
      %v497 = vpop.permute.xlu0 %496
      %498 = vrot.lane.b32.xlu0 %v480, 124
      %v499 = vpop.permute.xlu0 %498
      %500 = vrot.lane.b32.xlu0 %v481, 124
      %v501 = vpop.permute.xlu0 %500
      %502 = vrot.lane.b32.xlu0 %v476, 124
      %v503 = vpop.permute.xlu0 %502
      %v510 = vsel %vm345, %v482, 0
      %v512 = vsel %vm352, %v503, 0
      %514 = vmatpush.msra.mxu0 0.0
      %515 = vmatpush.msra.mxu0 0.0
      %516 = vmatpush.msra.mxu0 0.0
      %517 = vmatpush.msra.mxu0 0.0
      %518 = vmatpush.msra.mxu0 0.0
      %519 = vmatpush.msra.mxu0 0.0
      %520 = vmatpush.msra.mxu0 0.0
      %521 = vmatpush.msra.mxu0 0.0
      %522 = vmatpush.msra.mxu0 0.0
      %523 = vmatpush.msra.mxu0 0.0
      %524 = vmatpush.msra.mxu0 %v512
      %525 = vmatpush.msra.mxu0 %v501
      %526 = vmatpush.msra.mxu0 %v499
      %527 = vmatpush.msra.mxu0 %v497
      %528 = vmatpush.msra.mxu0 %v495
      %529 = vmatpush.msra.mxu0 %v493
      %530 = vmatmul.f32.gmra.mxu0 %v510
      %v531 = vpop.f32.mrf.mxu0
      %v532 = vadd.f32 %v486, %v531
      %533 = vdwg.mxu0
      %v534 = vsel %vm378, %v532, 0.0
      %535 = vadd.xlane.f32.xlu0 %v534
      %v536 = vpop.xlane.xlu0 %535
      %v537 = vrot.slane %v536, 4
      %v538 = vadd.f32 %v536, %v537
      %v539 = vrot.slane %v538, 2
      %v540 = vadd.f32 %v538, %v539
      %v541 = vrot.slane %v540, 1
      %v542 = vadd.f32 %v540, %v541
      %s543 = vtos %v542
      %v544 = vstv %s543
      %v545 = vmul.f32 %v544, %v396
      %v546 = vsub.f32 %v532, %v545
      %v547 = vmul.f32 %v546, %v546
      %v548 = vsel %vm378, %v547, 0.0
      %549 = vadd.xlane.f32.xlu0 %v548
      %v550 = vpop.xlane.xlu0 %549
      %v551 = vrot.slane %v550, 4
      %v552 = vadd.f32 %v550, %v551
      %v553 = vrot.slane %v552, 2
      %v554 = vadd.f32 %v552, %v553
      %v555 = vrot.slane %v554, 1
      %v556 = vadd.f32 %v554, %v555
      %s557 = vtos %v556
      %v558 = vstv %s557
      %v559 = vmul.f32 %v558, %v396
      %v560 = vadd.f32 %v559, 1e-05
      %v561 = vrsqrt.pop %v560
      %v562 = vmul.f32 %v561, %v560
      %v563 = vmul.f32 %v562, %v561
      %v564 = vmul.f32 0.5, %v563
      %v565 = vsub.f32 1.5, %v564
      %v566 = vmul.f32 %v561, %v565
      %vm567 = vweird.f32 %v560
      %vm568 = vweird.f32 %v561
      %vm569 = vmor %vm567, %vm568
      %v570 = vsel %vm569, %v561, %v566
      %v571 = vmul.f32 %v546, %v570
      %vm572 = vcmp.gt.f32.partialorder %v571, 0.0
      %v573 = vmul.f32 %v571, 0.1
      %v574 = vsel %vm572, %v571, %v573
      %v575 = vadd.f32 %v373, %v574
      %576 = vst.msk [vmem:[%s247] sm:$0xff] %vm378, %v575
      %p577 = scmp.lt.s32.totalorder %s18, 2
      %s578 = scalar_select %p577, %s18, 2
      %s579 = smul.addr %s578, 8
      %s580 = scalar_lea.vmem %s6, %s579
      // Predicated region
      $region45: #{step.3} parent=43 // pred_check
        %p581 = pneg %p167
      $region46: #{step.3} parent=43 // pred_check_branch
        %583 = sbr.rel (%p581) target = $region48
      $region47: #{step.3} parent=43 // pred_region
        _
      $region48: #{step.3} parent=43 // pred_fallthru
        _
    $region44: #{step.3} parent=5 // pred_fallthru
      _
    %p584 = scmp.le.s32.totalorder 2, %s13
    // Predicated region
    $region49: #{step.3} parent=5 // pred_check
      %p585 = pneg %p584
    $region50: #{step.3} parent=5 // pred_check_branch
      %587 = sbr.rel (%p585) target = $region52
    $region51: #{step.3} parent=5 // pred_region
      %s588 = ssub.s32 %s13, 2
      // Predicated region
      $region53: #{step.3} parent=51 // pred_check
        %p589 = pneg %p173
      $region54: #{step.3} parent=51 // pred_check_branch
        %591 = sbr.rel (%p589) target = $region56
      $region55: #{step.3} parent=51 // pred_region
        %p592 = scmp.lt.s32.totalorder %s19, 2
        %s593 = scalar_select %p592, %s19, 2
        %s594 = smul.addr %s593, 8
        %s595 = scalar_lea.vmem %s6, %s594
      $region56: #{step.3} parent=51 // pred_fallthru
        _
    $region52: #{step.3} parent=5 // pred_fallthru
      _
  $region6: #{step.3} parent=0 // loop_footer
    %s17 = sadd.s32 1, %s13
  $region7: #{step.3} parent=0 // loop_footer_branch
    %12 = sbr.rel target = $region3
  $region8: #{step.3} parent=0 // loop_exit
    _

</llo_original>
